<compile_context>
chip_gen: v7x
topology: tpu7x:2x2x1
jax: 0.10.0
libtpu: 0.0.40
codegen_flags: <defaults>
</compile_context>

<pallas_src>
import jax
import jax.numpy as jnp
import numpy as np
from jax.experimental import pallas as pl
from jax.experimental.pallas import tpu as pltpu

# --- model hyperparameters (small, consistent with the module) -------------
POP_SIZE = 8
BINS = 4
CELL_SIZE = 32                   # H
LAYERS_NUM = 2                   # L (the wavefront kernel is specialized to 2)
IN_SIZE = POP_SIZE + BINS * 2    # 16
OUT_SIZE = 2 * POP_SIZE          # 16

SEQ_LEN = 8
BATCH = 8                        # fill the 8-sublane dimension of every vreg


def _policy_net_kernel(x_ref, h0_ref, c0_ref,
                       wx_ref, bx_ref, wcomb_ref,
                       whead_ref, bhead_ref,
                       head_ref, hout_ref, cout_ref,
                       xg_scr, out_scr):
    """Single-invocation 2-layer LSTM forward (wavefront over layers).

    x_ref: time-major sequence with one zero timestep appended, flattened to
           ((T+1)*B, IN_SIZE).
    wx_ref/bx_ref: input projection + combined biases, columns interleaved as
           [i0,i1 | f0,f1 | g0,g1 | o0,o1] (layer0 / layer1 sub-blocks).
    wcomb_ref: (2H, 8H) block matrix [[W_hh0 | W_ih1], [0 | W_hh1]] in the same
           interleaved column layout, so [h0|h1] @ wcomb yields both layers'
           recurrent gate contributions in one matmul.
    """
    H = CELL_SIZE
    B = h0_ref.shape[1]
    S = x_ref.shape[0] // B          # T + 1 wavefront steps
    T = S - 1

    # 1) Batched non-recurrent projection for all timesteps at once, parked in
    #    a VMEM scratch so it does not stay live in vregs across the unrolled
    #    recurrence.
    xg_scr[...] = (jnp.dot(x_ref[...], wx_ref[...],
                           preferred_element_type=jnp.float32)
                   + bx_ref[...])                        # ((T+1)*B, 8H)

    wcomb = wcomb_ref[...]                               # (2H, 8H), hoisted
    # Fused state: [layer0 | layer1] along lanes — exactly the next step's LHS.
    h_all = jnp.concatenate([h0_ref[0], h0_ref[1]], axis=1)   # (B, 2H)
    c_all = jnp.concatenate([c0_ref[0], c0_ref[1]], axis=1)   # (B, 2H)

    lane = jax.lax.broadcasted_iota(jnp.int32, (B, 2 * H), 1)
    is_l0 = lane < H                                     # layer-0 half of state

    # 2) Wavefront recurrence: ONE (B,2H)x(2H,8H) matmul per serial step.
    for s in range(S):                                   # statically unrolled
        gates = xg_scr[s * B:(s + 1) * B, :] + jnp.dot(
            h_all, wcomb, preferred_element_type=jnp.float32)     # (B, 8H)

        # Column layout [i0,i1 | f0,f1 | g0,g1 | o0,o1]: 3 wide EUP pushes.
        sig_if = jax.nn.sigmoid(gates[:, 0:4 * H])       # i & f together
        i_all = sig_if[:, 0:2 * H]
        f_all = sig_if[:, 2 * H:4 * H]
        g_all = jnp.tanh(gates[:, 4 * H:6 * H])
        o_all = jax.nn.sigmoid(gates[:, 6 * H:8 * H])

        c_new = f_all * c_all + i_all * g_all
        h_new = o_all * jnp.tanh(c_new)

        if s == 0:            # layer1 has no t=-1 input yet: keep its half
            c_all = jnp.where(is_l0, c_new, c_all)
            h_all = jnp.where(is_l0, h_new, h_all)
        elif s == T:          # layer0 has no x_T: keep its half
            c_all = jnp.where(is_l0, c_all, c_new)
            h_all = jnp.where(is_l0, h_all, h_new)
        else:
            c_all = c_new
            h_all = h_new

        if s >= 1:            # layer-1 output at time s-1 -> VMEM scratch
            out_scr[(s - 1) * B:s * B, :] = h_all[:, H:2 * H]

    # Final states, written exactly once per layer.
    hout_ref[0] = h_all[:, 0:H]
    hout_ref[1] = h_all[:, H:2 * H]
    cout_ref[0] = c_all[:, 0:H]
    cout_ref[1] = c_all[:, H:2 * H]

    # 3) Fused mu/sigma head over all timesteps in one batched matmul, emitted
    #    as a single [mu | sigmoid] slab (split in the wrapper).
    head = (jnp.dot(out_scr[...], whead_ref[...],
                    preferred_element_type=jnp.float32)
            + bhead_ref[...])                            # (T*B, 2*OUT)
    out_lane = jax.lax.broadcasted_iota(jnp.int32, head.shape, 1)
    head_ref[...] = jnp.where(out_lane < OUT_SIZE, head, jax.nn.sigmoid(head))


def _full_spec(shape):
    nd = len(shape)
    return pl.BlockSpec(shape, lambda i, _nd=nd: (0,) * _nd)


def policy_net_forward(x, h, c, kernel_params):
    """Pallas equivalent of PolicyNet.forward. Returns (mu, sigma, h_, c_)."""
    T, B, I = x.shape
    L, _, H = h.shape
    (w_x_comb, bias_comb, w_comb, w_head, b_head) = kernel_params

    # Append one zero timestep so wavefront step s=T reads a valid row block
    # (its layer-0 half is discarded anyway), then flatten time-major.
    x_pad = jnp.concatenate([x, jnp.zeros((1, B, I), x.dtype)], axis=0)
    x_flat = x_pad.reshape((T + 1) * B, I)

    out_shapes = (
        jax.ShapeDtypeStruct((T * B, 2 * OUT_SIZE), jnp.float32),  # [mu|sigma]
        jax.ShapeDtypeStruct((L, B, H), jnp.float32),              # h_
        jax.ShapeDtypeStruct((L, B, H), jnp.float32),              # c_
    )

    grid_spec = pltpu.PrefetchScalarGridSpec(
        num_scalar_prefetch=0,
        grid=(1,),                                       # single invocation
        in_specs=[
            _full_spec(((T + 1) * B, I)),                # x (flattened, padded)
            _full_spec((L, B, H)),                       # h0
            _full_spec((L, B, H)),                       # c0
            _full_spec(w_x_comb.shape),                  # (I, 8H)
            _full_spec(bias_comb.shape),                 # (1, 8H)
            _full_spec(w_comb.shape),                    # (2H, 8H)
            _full_spec(w_head.shape),                    # (H, 2*OUT)
            _full_spec(b_head.shape),                    # (1, 2*OUT)
        ],
        out_specs=[_full_spec(s.shape) for s in out_shapes],
        scratch_shapes=[
            pltpu.VMEM(((T + 1) * B, 8 * H), jnp.float32),   # batched x-proj
            pltpu.VMEM((T * B, H), jnp.float32),             # layer-1 outputs
        ],
    )

    head_out, h_, c_ = pl.pallas_call(
        _policy_net_kernel,
        out_shape=out_shapes,
        grid_spec=grid_spec,
        compiler_params=pltpu.CompilerParams(
            dimension_semantics=("arbitrary",)),
    )(x_flat, h, c, w_x_comb, bias_comb, w_comb, w_head, b_head)

    mu = head_out[:, :OUT_SIZE].reshape(T, B, OUT_SIZE)
    sigma = head_out[:, OUT_SIZE:].reshape(T, B, OUT_SIZE)
    return mu, sigma, h_, c_


# jit the wrapper so pad/reshape/split + the kernel are one dispatched program.
policy_net_forward = jax.jit(policy_net_forward)


# --- parameter construction --------------------------------------------------
def init_torch_params(key):
    """Deterministic init mimicking PyTorch uniform(-1/sqrt(H), 1/sqrt(H))."""
    H = CELL_SIZE
    ks = jax.random.split(key, 12)
    bnd = 1.0 / (H ** 0.5)

    def u(k, shape):
        return jax.random.uniform(k, shape, jnp.float32, -bnd, bnd)

    return (u(ks[0], (4 * H, IN_SIZE)), u(ks[1], (4 * H, H)),   # w_ih0, w_hh0
            u(ks[2], (4 * H,)), u(ks[3], (4 * H,)),             # b_ih0, b_hh0
            u(ks[4], (4 * H, H)), u(ks[5], (4 * H, H)),         # w_ih1, w_hh1
            u(ks[6], (4 * H,)), u(ks[7], (4 * H,)),             # b_ih1, b_hh1
            u(ks[8], (OUT_SIZE, H)), u(ks[9], (OUT_SIZE,)),     # w_mu, b_mu
            u(ks[10], (OUT_SIZE, H)), u(ks[11], (OUT_SIZE,)))   # w_sg, b_sg


def pack_params(torch_params):
    """Repack torch-layout weights into the kernel's fused/interleaved layout."""
    (w_ih0, w_hh0, b_ih0, b_hh0,
     w_ih1, w_hh1, b_ih1, b_hh1,
     w_mu, b_mu, w_sg, b_sg) = torch_params
    H = CELL_SIZE

    wih0_t = w_ih0.T          # (I, 4H)
    whh0_t = w_hh0.T          # (H, 4H)
    wih1_t = w_ih1.T          # (H, 4H)
    whh1_t = w_hh1.T          # (H, 4H)
    b0 = (b_ih0 + b_hh0)[None, :]
    b1 = (b_ih1 + b_hh1)[None, :]

    def interleave_cols(a0, a1):
        # (rows, 4H) x2 -> (rows, 8H) laid out [i0,i1 | f0,f1 | g0,g1 | o0,o1]
        parts = []
        for k in range(4):
            parts.append(a0[:, k * H:(k + 1) * H])
            parts.append(a1[:, k * H:(k + 1) * H])
        return jnp.concatenate(parts, axis=1)

    w_x_comb = interleave_cols(wih0_t, jnp.zeros((IN_SIZE, 4 * H), jnp.float32))
    bias_comb = interleave_cols(b0, b1)                            # (1, 8H)
    w_comb = jnp.concatenate(
        [interleave_cols(whh0_t, wih1_t),                          # h0 rows
         interleave_cols(jnp.zeros((H, 4 * H), jnp.float32), whh1_t)],  # h1 rows
        axis=0)                                                    # (2H, 8H)

    w_head = jnp.concatenate([w_mu.T, w_sg.T], axis=1)             # (H, 2*OUT)
    b_head = jnp.concatenate([b_mu, b_sg])[None, :]                # (1, 2*OUT)
    return (w_x_comb, bias_comb, w_comb, w_head, b_head)


# --- float64 host reference (validation) ------------------------------------
def policy_net_reference(x, h, c, torch_params):
    p = [np.asarray(a, dtype=np.float64) for a in torch_params]
    (w_ih0, w_hh0, b_ih0, b_hh0, w_ih1, w_hh1, b_ih1, b_hh1,
     w_mu, b_mu, w_sg, b_sg) = p
    x = np.asarray(x, np.float64)
    hs = [np.asarray(h[l], np.float64) for l in range(LAYERS_NUM)]
    cs = [np.asarray(c[l], np.float64) for l in range(LAYERS_NUM)]
    H = CELL_SIZE

    def sig(v):
        return 1.0 / (1.0 + np.exp(-v))

    w_ih = [w_ih0, w_ih1]
    w_hh = [w_hh0, w_hh1]
    b = [b_ih0 + b_hh0, b_ih1 + b_hh1]
    outs = []
    for t in range(x.shape[0]):
        inp = x[t]
        for l in range(LAYERS_NUM):
            g = inp @ w_ih[l].T + hs[l] @ w_hh[l].T + b[l]
            i_g = sig(g[:, 0 * H:1 * H])
            f_g = sig(g[:, 1 * H:2 * H])
            g_g = np.tanh(g[:, 2 * H:3 * H])
            o_g = sig(g[:, 3 * H:4 * H])
            cs[l] = f_g * cs[l] + i_g * g_g
            hs[l] = o_g * np.tanh(cs[l])
            inp = hs[l]
        outs.append(inp)
    cell = np.stack(outs, axis=0)
    mu = cell @ w_mu.T + b_mu
    sigma = sig(cell @ w_sg.T + b_sg)
    return mu, sigma, np.stack(hs, axis=0), np.stack(cs, axis=0)


if __name__ == "__main__":
    key = jax.random.PRNGKey(0)
    kp, kx, kh, kc = jax.random.split(key, 4)

    torch_params = init_torch_params(kp)
    kernel_params = pack_params(torch_params)

    x = jax.random.normal(kx, (SEQ_LEN, BATCH, IN_SIZE), jnp.float32)
    h0 = jax.random.normal(kh, (LAYERS_NUM, BATCH, CELL_SIZE), jnp.float32)
    c0 = jax.random.normal(kc, (LAYERS_NUM, BATCH, CELL_SIZE), jnp.float32)

    mu, sigma, h_, c_ = jax.block_until_ready(
        policy_net_forward(x, h0, c0, kernel_params))

    mu_r, sg_r, h_r, c_r = policy_net_reference(x, h0, c0, torch_params)

    # f32 on-device (exact multi-pass MXU) vs f64 host reference.
    tol = dict(rtol=1e-3, atol=1e-3)
    np.testing.assert_allclose(np.asarray(mu), mu_r, **tol)
    np.testing.assert_allclose(np.asarray(sigma), sg_r, **tol)
    np.testing.assert_allclose(np.asarray(h_), h_r, **tol)
    np.testing.assert_allclose(np.asarray(c_), c_r, **tol)

    # TODO(synk): PolicyNet.sampler (torch.distributions.Normal sampling +
    # np.clip) is host-side RNG utility, not part of the forward hot path; it
    # is intentionally not kernelized.
    print("KERNEL_OK")
</pallas_src>

<mosaic_0001>
module attributes {stable_mosaic.version = 11 : i64} {
  func.func @_policy_net_kernel(%arg0: i32, %arg1: memref<72x16xf32, #tpu.memory_space<vmem>>, %arg2: memref<2x8x32xf32, #tpu.memory_space<vmem>>, %arg3: memref<2x8x32xf32, #tpu.memory_space<vmem>>, %arg4: memref<16x256xf32, #tpu.memory_space<vmem>>, %arg5: memref<1x256xf32, #tpu.memory_space<vmem>>, %arg6: memref<64x256xf32, #tpu.memory_space<vmem>>, %arg7: memref<32x32xf32, #tpu.memory_space<vmem>>, %arg8: memref<1x32xf32, #tpu.memory_space<vmem>>, %arg9: memref<64x32xf32, #tpu.memory_space<vmem>>, %arg10: memref<2x8x32xf32, #tpu.memory_space<vmem>>, %arg11: memref<2x8x32xf32, #tpu.memory_space<vmem>>, %arg12: memref<72x256xf32, #tpu.memory_space<vmem>>, %arg13: memref<64x32xf32, #tpu.memory_space<vmem>>) attributes {dimension_semantics = [#tpu.dimension_semantics<arbitrary>], iteration_bounds = array<i64: 1>, scalar_prefetch = 0 : i64, scratch_operands = 2 : i64, tpu.core_type = #tpu.core_type<tc>, window_params = [{pipeline_mode = #tpu.pipeline_mode<synchronous>, transform_indices = @transform_0, window_bounds = array<i64: 72, 16>}, {pipeline_mode = #tpu.pipeline_mode<synchronous>, transform_indices = @transform_1, window_bounds = array<i64: 2, 8, 32>}, {pipeline_mode = #tpu.pipeline_mode<synchronous>, transform_indices = @transform_2, window_bounds = array<i64: 2, 8, 32>}, {pipeline_mode = #tpu.pipeline_mode<synchronous>, transform_indices = @transform_3, window_bounds = array<i64: 16, 256>}, {pipeline_mode = #tpu.pipeline_mode<synchronous>, transform_indices = @transform_4, window_bounds = array<i64: 1, 256>}, {pipeline_mode = #tpu.pipeline_mode<synchronous>, transform_indices = @transform_5, window_bounds = array<i64: 64, 256>}, {pipeline_mode = #tpu.pipeline_mode<synchronous>, transform_indices = @transform_6, window_bounds = array<i64: 32, 32>}, {pipeline_mode = #tpu.pipeline_mode<synchronous>, transform_indices = @transform_7, window_bounds = array<i64: 1, 32>}, {pipeline_mode = #tpu.pipeline_mode<synchronous>, transform_indices = @transform_8, window_bounds = array<i64: 64, 32>}, {pipeline_mode = #tpu.pipeline_mode<synchronous>, transform_indices = @transform_9, window_bounds = array<i64: 2, 8, 32>}, {pipeline_mode = #tpu.pipeline_mode<synchronous>, transform_indices = @transform_10, window_bounds = array<i64: 2, 8, 32>}]} {
    %c0 = arith.constant 0 : index
    %c0_0 = arith.constant 0 : index
    %0 = vector.load %arg1[%c0, %c0_0] : memref<72x16xf32, #tpu.memory_space<vmem>>, vector<72x16xf32>
    %c0_1 = arith.constant 0 : index
    %c0_2 = arith.constant 0 : index
    %1 = vector.load %arg4[%c0_1, %c0_2] : memref<16x256xf32, #tpu.memory_space<vmem>>, vector<16x256xf32>
    %cst = arith.constant dense<0.000000e+00> : vector<72x256xf32>
    %2 = tpu.matmul %0, %1, %cst {dimension_numbers = #tpu.dot_dimension_numbers<[1], [0], [0], [1], [0, 0, 1, 1], [], []>} : vector<72x16xf32>, vector<16x256xf32>, vector<72x256xf32> -> vector<72x256xf32>
    %c0_3 = arith.constant 0 : index
    %c0_4 = arith.constant 0 : index
    %3 = vector.load %arg5[%c0_3, %c0_4] : memref<1x256xf32, #tpu.memory_space<vmem>>, vector<1x256xf32>
    %4 = vector.broadcast %3 : vector<1x256xf32> to vector<72x256xf32>
    %5 = arith.addf %2, %4 : vector<72x256xf32>
    %c0_5 = arith.constant 0 : index
    %c0_6 = arith.constant 0 : index
    %6 = vector.load %arg12[%c0_5, %c0_6] : memref<72x256xf32, #tpu.memory_space<vmem>>, vector<72x256xf32>
    tpu.vector_store %arg12[%c0_5, %c0_6], %5 {strides = array<i32>} : memref<72x256xf32, #tpu.memory_space<vmem>>, vector<72x256xf32>,
    %c0_7 = arith.constant 0 : index
    %c0_8 = arith.constant 0 : index
    %7 = vector.load %arg6[%c0_7, %c0_8] : memref<64x256xf32, #tpu.memory_space<vmem>>, vector<64x256xf32>
    %c0_9 = arith.constant 0 : index
    %c0_10 = arith.constant 0 : index
    %c0_11 = arith.constant 0 : index
    %8 = vector.load %arg2[%c0_9, %c0_10, %c0_11] : memref<2x8x32xf32, #tpu.memory_space<vmem>>, vector<1x8x32xf32>
    %9 = vector.shape_cast %8 : vector<1x8x32xf32> to vector<8x32xf32>
    %c1 = arith.constant 1 : index
    %c0_12 = arith.constant 0 : index
    %c0_13 = arith.constant 0 : index
    %10 = vector.load %arg2[%c1, %c0_12, %c0_13] : memref<2x8x32xf32, #tpu.memory_space<vmem>>, vector<1x8x32xf32>
    %11 = vector.shape_cast %10 : vector<1x8x32xf32> to vector<8x32xf32>
    %12 = tpu.concatenate %9, %11 in 1 : vector<8x32xf32>, vector<8x32xf32> -> vector<8x64xf32>
    %c0_14 = arith.constant 0 : index
    %c0_15 = arith.constant 0 : index
    %c0_16 = arith.constant 0 : index
    %13 = vector.load %arg3[%c0_14, %c0_15, %c0_16] : memref<2x8x32xf32, #tpu.memory_space<vmem>>, vector<1x8x32xf32>
    %14 = vector.shape_cast %13 : vector<1x8x32xf32> to vector<8x32xf32>
    %c1_17 = arith.constant 1 : index
    %c0_18 = arith.constant 0 : index
    %c0_19 = arith.constant 0 : index
    %15 = vector.load %arg3[%c1_17, %c0_18, %c0_19] : memref<2x8x32xf32, #tpu.memory_space<vmem>>, vector<1x8x32xf32>
    %16 = vector.shape_cast %15 : vector<1x8x32xf32> to vector<8x32xf32>
    %17 = tpu.concatenate %14, %16 in 1 : vector<8x32xf32>, vector<8x32xf32> -> vector<8x64xf32>
    %18 = tpu.iota {dimensions = array<i32: 1>} : vector<8x64xi32>
    %c32_i32 = arith.constant 32 : i32
    %19 = vector.broadcast %c32_i32 : i32 to vector<8x64xi32>
    %20 = arith.cmpi slt, %18, %19 : vector<8x64xi32>
    %c0_20 = arith.constant 0 : index
    %c0_21 = arith.constant 0 : index
    %21 = vector.load %arg12[%c0_20, %c0_21] : memref<72x256xf32, #tpu.memory_space<vmem>>, vector<8x256xf32>
    %cst_22 = arith.constant dense<0.000000e+00> : vector<8x256xf32>
    %22 = tpu.matmul %12, %7, %cst_22 {dimension_numbers = #tpu.dot_dimension_numbers<[1], [0], [0], [1], [0, 0, 1, 1], [], []>} : vector<8x64xf32>, vector<64x256xf32>, vector<8x256xf32> -> vector<8x256xf32>
    %23 = arith.addf %21, %22 : vector<8x256xf32>
    %24 = vector.extract_strided_slice %23 {offsets = [0, 0], sizes = [8, 128], strides = [1, 1]} : vector<8x256xf32> to vector<8x128xf32>
    %25 = arith.negf %24 : vector<8x128xf32>
    %26 = math.exp %25 : vector<8x128xf32>
    %cst_23 = arith.constant 1.000000e+00 : f32
    %27 = vector.broadcast %cst_23 : f32 to vector<8x128xf32>
    %28 = arith.addf %27, %26 : vector<8x128xf32>
    %29 = arith.divf %27, %28 : vector<8x128xf32>
    %30 = vector.extract_strided_slice %29 {offsets = [0, 0], sizes = [8, 64], strides = [1, 1]} : vector<8x128xf32> to vector<8x64xf32>
    %31 = vector.extract_strided_slice %29 {offsets = [0, 64], sizes = [8, 64], strides = [1, 1]} : vector<8x128xf32> to vector<8x64xf32>
    %32 = vector.extract_strided_slice %23 {offsets = [0, 128], sizes = [8, 64], strides = [1, 1]} : vector<8x256xf32> to vector<8x64xf32>
    %33 = math.tanh %32 : vector<8x64xf32>
    %34 = vector.extract_strided_slice %23 {offsets = [0, 192], sizes = [8, 64], strides = [1, 1]} : vector<8x256xf32> to vector<8x64xf32>
    %35 = arith.negf %34 : vector<8x64xf32>
    %36 = math.exp %35 : vector<8x64xf32>
    %cst_24 = arith.constant 1.000000e+00 : f32
    %37 = vector.broadcast %cst_24 : f32 to vector<8x64xf32>
    %38 = arith.addf %37, %36 : vector<8x64xf32>
    %39 = arith.divf %37, %38 : vector<8x64xf32>
    %40 = arith.mulf %31, %17 : vector<8x64xf32>
    %41 = arith.mulf %30, %33 : vector<8x64xf32>
    %42 = arith.addf %40, %41 : vector<8x64xf32>
    %43 = math.tanh %42 : vector<8x64xf32>
    %44 = arith.mulf %39, %43 : vector<8x64xf32>
    %45 = arith.select %20, %42, %17 : vector<8x64xi1>, vector<8x64xf32>
    %46 = arith.select %20, %44, %12 : vector<8x64xi1>, vector<8x64xf32>
    %c8 = arith.constant 8 : index
    %c0_25 = arith.constant 0 : index
    %47 = vector.load %arg12[%c8, %c0_25] : memref<72x256xf32, #tpu.memory_space<vmem>>, vector<8x256xf32>
    %cst_26 = arith.constant dense<0.000000e+00> : vector<8x256xf32>
    %48 = tpu.matmul %46, %7, %cst_26 {dimension_numbers = #tpu.dot_dimension_numbers<[1], [0], [0], [1], [0, 0, 1, 1], [], []>} : vector<8x64xf32>, vector<64x256xf32>, vector<8x256xf32> -> vector<8x256xf32>
    %49 = arith.addf %47, %48 : vector<8x256xf32>
    %50 = vector.extract_strided_slice %49 {offsets = [0, 0], sizes = [8, 128], strides = [1, 1]} : vector<8x256xf32> to vector<8x128xf32>
    %51 = arith.negf %50 : vector<8x128xf32>
    %52 = math.exp %51 : vector<8x128xf32>
    %cst_27 = arith.constant 1.000000e+00 : f32
    %53 = vector.broadcast %cst_27 : f32 to vector<8x128xf32>
    %54 = arith.addf %53, %52 : vector<8x128xf32>
    %55 = arith.divf %53, %54 : vector<8x128xf32>
    %56 = vector.extract_strided_slice %55 {offsets = [0, 0], sizes = [8, 64], strides = [1, 1]} : vector<8x128xf32> to vector<8x64xf32>
    %57 = vector.extract_strided_slice %55 {offsets = [0, 64], sizes = [8, 64], strides = [1, 1]} : vector<8x128xf32> to vector<8x64xf32>
    %58 = vector.extract_strided_slice %49 {offsets = [0, 128], sizes = [8, 64], strides = [1, 1]} : vector<8x256xf32> to vector<8x64xf32>
    %59 = math.tanh %58 : vector<8x64xf32>
    %60 = vector.extract_strided_slice %49 {offsets = [0, 192], sizes = [8, 64], strides = [1, 1]} : vector<8x256xf32> to vector<8x64xf32>
    %61 = arith.negf %60 : vector<8x64xf32>
    %62 = math.exp %61 : vector<8x64xf32>
    %cst_28 = arith.constant 1.000000e+00 : f32
    %63 = vector.broadcast %cst_28 : f32 to vector<8x64xf32>
    %64 = arith.addf %63, %62 : vector<8x64xf32>
    %65 = arith.divf %63, %64 : vector<8x64xf32>
    %66 = arith.mulf %57, %45 : vector<8x64xf32>
    %67 = arith.mulf %56, %59 : vector<8x64xf32>
    %68 = arith.addf %66, %67 : vector<8x64xf32>
    %69 = math.tanh %68 : vector<8x64xf32>
    %70 = arith.mulf %65, %69 : vector<8x64xf32>
    %71 = vector.extract_strided_slice %70 {offsets = [0, 32], sizes = [8, 32], strides = [1, 1]} : vector<8x64xf32> to vector<8x32xf32>
    %c0_29 = arith.constant 0 : index
    %c0_30 = arith.constant 0 : index
    %72 = vector.load %arg13[%c0_29, %c0_30] : memref<64x32xf32, #tpu.memory_space<vmem>>, vector<8x32xf32>
    tpu.vector_store %arg13[%c0_29, %c0_30], %71 {strides = array<i32>} : memref<64x32xf32, #tpu.memory_space<vmem>>, vector<8x32xf32>,
    %c16 = arith.constant 16 : index
    %c0_31 = arith.constant 0 : index
    %73 = vector.load %arg12[%c16, %c0_31] : memref<72x256xf32, #tpu.memory_space<vmem>>, vector<8x256xf32>
    %cst_32 = arith.constant dense<0.000000e+00> : vector<8x256xf32>
    %74 = tpu.matmul %70, %7, %cst_32 {dimension_numbers = #tpu.dot_dimension_numbers<[1], [0], [0], [1], [0, 0, 1, 1], [], []>} : vector<8x64xf32>, vector<64x256xf32>, vector<8x256xf32> -> vector<8x256xf32>
    %75 = arith.addf %73, %74 : vector<8x256xf32>
    %76 = vector.extract_strided_slice %75 {offsets = [0, 0], sizes = [8, 128], strides = [1, 1]} : vector<8x256xf32> to vector<8x128xf32>
    %77 = arith.negf %76 : vector<8x128xf32>
    %78 = math.exp %77 : vector<8x128xf32>
    %cst_33 = arith.constant 1.000000e+00 : f32
    %79 = vector.broadcast %cst_33 : f32 to vector<8x128xf32>
    %80 = arith.addf %79, %78 : vector<8x128xf32>
    %81 = arith.divf %79, %80 : vector<8x128xf32>
    %82 = vector.extract_strided_slice %81 {offsets = [0, 0], sizes = [8, 64], strides = [1, 1]} : vector<8x128xf32> to vector<8x64xf32>
    %83 = vector.extract_strided_slice %81 {offsets = [0, 64], sizes = [8, 64], strides = [1, 1]} : vector<8x128xf32> to vector<8x64xf32>
    %84 = vector.extract_strided_slice %75 {offsets = [0, 128], sizes = [8, 64], strides = [1, 1]} : vector<8x256xf32> to vector<8x64xf32>
    %85 = math.tanh %84 : vector<8x64xf32>
    %86 = vector.extract_strided_slice %75 {offsets = [0, 192], sizes = [8, 64], strides = [1, 1]} : vector<8x256xf32> to vector<8x64xf32>
    %87 = arith.negf %86 : vector<8x64xf32>
    %88 = math.exp %87 : vector<8x64xf32>
    %cst_34 = arith.constant 1.000000e+00 : f32
    %89 = vector.broadcast %cst_34 : f32 to vector<8x64xf32>
    %90 = arith.addf %89, %88 : vector<8x64xf32>
    %91 = arith.divf %89, %90 : vector<8x64xf32>
    %92 = arith.mulf %83, %68 : vector<8x64xf32>
    %93 = arith.mulf %82, %85 : vector<8x64xf32>
    %94 = arith.addf %92, %93 : vector<8x64xf32>
    %95 = math.tanh %94 : vector<8x64xf32>
    %96 = arith.mulf %91, %95 : vector<8x64xf32>
    %97 = vector.extract_strided_slice %96 {offsets = [0, 32], sizes = [8, 32], strides = [1, 1]} : vector<8x64xf32> to vector<8x32xf32>
    %c8_35 = arith.constant 8 : index
    %c0_36 = arith.constant 0 : index
    %98 = vector.load %arg13[%c8_35, %c0_36] : memref<64x32xf32, #tpu.memory_space<vmem>>, vector<8x32xf32>
    tpu.vector_store %arg13[%c8_35, %c0_36], %97 {strides = array<i32>} : memref<64x32xf32, #tpu.memory_space<vmem>>, vector<8x32xf32>,
    %c24 = arith.constant 24 : index
    %c0_37 = arith.constant 0 : index
    %99 = vector.load %arg12[%c24, %c0_37] : memref<72x256xf32, #tpu.memory_space<vmem>>, vector<8x256xf32>
    %cst_38 = arith.constant dense<0.000000e+00> : vector<8x256xf32>
    %100 = tpu.matmul %96, %7, %cst_38 {dimension_numbers = #tpu.dot_dimension_numbers<[1], [0], [0], [1], [0, 0, 1, 1], [], []>} : vector<8x64xf32>, vector<64x256xf32>, vector<8x256xf32> -> vector<8x256xf32>
    %101 = arith.addf %99, %100 : vector<8x256xf32>
    %102 = vector.extract_strided_slice %101 {offsets = [0, 0], sizes = [8, 128], strides = [1, 1]} : vector<8x256xf32> to vector<8x128xf32>
    %103 = arith.negf %102 : vector<8x128xf32>
    %104 = math.exp %103 : vector<8x128xf32>
    %cst_39 = arith.constant 1.000000e+00 : f32
    %105 = vector.broadcast %cst_39 : f32 to vector<8x128xf32>
    %106 = arith.addf %105, %104 : vector<8x128xf32>
    %107 = arith.divf %105, %106 : vector<8x128xf32>
    %108 = vector.extract_strided_slice %107 {offsets = [0, 0], sizes = [8, 64], strides = [1, 1]} : vector<8x128xf32> to vector<8x64xf32>
    %109 = vector.extract_strided_slice %107 {offsets = [0, 64], sizes = [8, 64], strides = [1, 1]} : vector<8x128xf32> to vector<8x64xf32>
    %110 = vector.extract_strided_slice %101 {offsets = [0, 128], sizes = [8, 64], strides = [1, 1]} : vector<8x256xf32> to vector<8x64xf32>
    %111 = math.tanh %110 : vector<8x64xf32>
    %112 = vector.extract_strided_slice %101 {offsets = [0, 192], sizes = [8, 64], strides = [1, 1]} : vector<8x256xf32> to vector<8x64xf32>
    %113 = arith.negf %112 : vector<8x64xf32>
    %114 = math.exp %113 : vector<8x64xf32>
    %cst_40 = arith.constant 1.000000e+00 : f32
    %115 = vector.broadcast %cst_40 : f32 to vector<8x64xf32>
    %116 = arith.addf %115, %114 : vector<8x64xf32>
    %117 = arith.divf %115, %116 : vector<8x64xf32>
    %118 = arith.mulf %109, %94 : vector<8x64xf32>
    %119 = arith.mulf %108, %111 : vector<8x64xf32>
    %120 = arith.addf %118, %119 : vector<8x64xf32>
    %121 = math.tanh %120 : vector<8x64xf32>
    %122 = arith.mulf %117, %121 : vector<8x64xf32>
    %123 = vector.extract_strided_slice %122 {offsets = [0, 32], sizes = [8, 32], strides = [1, 1]} : vector<8x64xf32> to vector<8x32xf32>
    %c16_41 = arith.constant 16 : index
    %c0_42 = arith.constant 0 : index
    %124 = vector.load %arg13[%c16_41, %c0_42] : memref<64x32xf32, #tpu.memory_space<vmem>>, vector<8x32xf32>
    tpu.vector_store %arg13[%c16_41, %c0_42], %123 {strides = array<i32>} : memref<64x32xf32, #tpu.memory_space<vmem>>, vector<8x32xf32>,
    %c32 = arith.constant 32 : index
    %c0_43 = arith.constant 0 : index
    %125 = vector.load %arg12[%c32, %c0_43] : memref<72x256xf32, #tpu.memory_space<vmem>>, vector<8x256xf32>
    %cst_44 = arith.constant dense<0.000000e+00> : vector<8x256xf32>
    %126 = tpu.matmul %122, %7, %cst_44 {dimension_numbers = #tpu.dot_dimension_numbers<[1], [0], [0], [1], [0, 0, 1, 1], [], []>} : vector<8x64xf32>, vector<64x256xf32>, vector<8x256xf32> -> vector<8x256xf32>
    %127 = arith.addf %125, %126 : vector<8x256xf32>
    %128 = vector.extract_strided_slice %127 {offsets = [0, 0], sizes = [8, 128], strides = [1, 1]} : vector<8x256xf32> to vector<8x128xf32>
    %129 = arith.negf %128 : vector<8x128xf32>
    %130 = math.exp %129 : vector<8x128xf32>
    %cst_45 = arith.constant 1.000000e+00 : f32
    %131 = vector.broadcast %cst_45 : f32 to vector<8x128xf32>
    %132 = arith.addf %131, %130 : vector<8x128xf32>
    %133 = arith.divf %131, %132 : vector<8x128xf32>
    %134 = vector.extract_strided_slice %133 {offsets = [0, 0], sizes = [8, 64], strides = [1, 1]} : vector<8x128xf32> to vector<8x64xf32>
    %135 = vector.extract_strided_slice %133 {offsets = [0, 64], sizes = [8, 64], strides = [1, 1]} : vector<8x128xf32> to vector<8x64xf32>
    %136 = vector.extract_strided_slice %127 {offsets = [0, 128], sizes = [8, 64], strides = [1, 1]} : vector<8x256xf32> to vector<8x64xf32>
    %137 = math.tanh %136 : vector<8x64xf32>
    %138 = vector.extract_strided_slice %127 {offsets = [0, 192], sizes = [8, 64], strides = [1, 1]} : vector<8x256xf32> to vector<8x64xf32>
    %139 = arith.negf %138 : vector<8x64xf32>
    %140 = math.exp %139 : vector<8x64xf32>
    %cst_46 = arith.constant 1.000000e+00 : f32
    %141 = vector.broadcast %cst_46 : f32 to vector<8x64xf32>
    %142 = arith.addf %141, %140 : vector<8x64xf32>
    %143 = arith.divf %141, %142 : vector<8x64xf32>
    %144 = arith.mulf %135, %120 : vector<8x64xf32>
    %145 = arith.mulf %134, %137 : vector<8x64xf32>
    %146 = arith.addf %144, %145 : vector<8x64xf32>
    %147 = math.tanh %146 : vector<8x64xf32>
    %148 = arith.mulf %143, %147 : vector<8x64xf32>
    %149 = vector.extract_strided_slice %148 {offsets = [0, 32], sizes = [8, 32], strides = [1, 1]} : vector<8x64xf32> to vector<8x32xf32>
    %c24_47 = arith.constant 24 : index
    %c0_48 = arith.constant 0 : index
    %150 = vector.load %arg13[%c24_47, %c0_48] : memref<64x32xf32, #tpu.memory_space<vmem>>, vector<8x32xf32>
    tpu.vector_store %arg13[%c24_47, %c0_48], %149 {strides = array<i32>} : memref<64x32xf32, #tpu.memory_space<vmem>>, vector<8x32xf32>,
    %c40 = arith.constant 40 : index
    %c0_49 = arith.constant 0 : index
    %151 = vector.load %arg12[%c40, %c0_49] : memref<72x256xf32, #tpu.memory_space<vmem>>, vector<8x256xf32>
    %cst_50 = arith.constant dense<0.000000e+00> : vector<8x256xf32>
    %152 = tpu.matmul %148, %7, %cst_50 {dimension_numbers = #tpu.dot_dimension_numbers<[1], [0], [0], [1], [0, 0, 1, 1], [], []>} : vector<8x64xf32>, vector<64x256xf32>, vector<8x256xf32> -> vector<8x256xf32>
    %153 = arith.addf %151, %152 : vector<8x256xf32>
    %154 = vector.extract_strided_slice %153 {offsets = [0, 0], sizes = [8, 128], strides = [1, 1]} : vector<8x256xf32> to vector<8x128xf32>
    %155 = arith.negf %154 : vector<8x128xf32>
    %156 = math.exp %155 : vector<8x128xf32>
    %cst_51 = arith.constant 1.000000e+00 : f32
    %157 = vector.broadcast %cst_51 : f32 to vector<8x128xf32>
    %158 = arith.addf %157, %156 : vector<8x128xf32>
    %159 = arith.divf %157, %158 : vector<8x128xf32>
    %160 = vector.extract_strided_slice %159 {offsets = [0, 0], sizes = [8, 64], strides = [1, 1]} : vector<8x128xf32> to vector<8x64xf32>
    %161 = vector.extract_strided_slice %159 {offsets = [0, 64], sizes = [8, 64], strides = [1, 1]} : vector<8x128xf32> to vector<8x64xf32>
    %162 = vector.extract_strided_slice %153 {offsets = [0, 128], sizes = [8, 64], strides = [1, 1]} : vector<8x256xf32> to vector<8x64xf32>
    %163 = math.tanh %162 : vector<8x64xf32>
    %164 = vector.extract_strided_slice %153 {offsets = [0, 192], sizes = [8, 64], strides = [1, 1]} : vector<8x256xf32> to vector<8x64xf32>
    %165 = arith.negf %164 : vector<8x64xf32>
    %166 = math.exp %165 : vector<8x64xf32>
    %cst_52 = arith.constant 1.000000e+00 : f32
    %167 = vector.broadcast %cst_52 : f32 to vector<8x64xf32>
    %168 = arith.addf %167, %166 : vector<8x64xf32>
    %169 = arith.divf %167, %168 : vector<8x64xf32>
    %170 = arith.mulf %161, %146 : vector<8x64xf32>
    %171 = arith.mulf %160, %163 : vector<8x64xf32>
    %172 = arith.addf %170, %171 : vector<8x64xf32>
    %173 = math.tanh %172 : vector<8x64xf32>
    %174 = arith.mulf %169, %173 : vector<8x64xf32>
    %175 = vector.extract_strided_slice %174 {offsets = [0, 32], sizes = [8, 32], strides = [1, 1]} : vector<8x64xf32> to vector<8x32xf32>
    %c32_53 = arith.constant 32 : index
    %c0_54 = arith.constant 0 : index
    %176 = vector.load %arg13[%c32_53, %c0_54] : memref<64x32xf32, #tpu.memory_space<vmem>>, vector<8x32xf32>
    tpu.vector_store %arg13[%c32_53, %c0_54], %175 {strides = array<i32>} : memref<64x32xf32, #tpu.memory_space<vmem>>, vector<8x32xf32>,
    %c48 = arith.constant 48 : index
    %c0_55 = arith.constant 0 : index
    %177 = vector.load %arg12[%c48, %c0_55] : memref<72x256xf32, #tpu.memory_space<vmem>>, vector<8x256xf32>
    %cst_56 = arith.constant dense<0.000000e+00> : vector<8x256xf32>
    %178 = tpu.matmul %174, %7, %cst_56 {dimension_numbers = #tpu.dot_dimension_numbers<[1], [0], [0], [1], [0, 0, 1, 1], [], []>} : vector<8x64xf32>, vector<64x256xf32>, vector<8x256xf32> -> vector<8x256xf32>
    %179 = arith.addf %177, %178 : vector<8x256xf32>
    %180 = vector.extract_strided_slice %179 {offsets = [0, 0], sizes = [8, 128], strides = [1, 1]} : vector<8x256xf32> to vector<8x128xf32>
    %181 = arith.negf %180 : vector<8x128xf32>
    %182 = math.exp %181 : vector<8x128xf32>
    %cst_57 = arith.constant 1.000000e+00 : f32
    %183 = vector.broadcast %cst_57 : f32 to vector<8x128xf32>
    %184 = arith.addf %183, %182 : vector<8x128xf32>
    %185 = arith.divf %183, %184 : vector<8x128xf32>
    %186 = vector.extract_strided_slice %185 {offsets = [0, 0], sizes = [8, 64], strides = [1, 1]} : vector<8x128xf32> to vector<8x64xf32>
    %187 = vector.extract_strided_slice %185 {offsets = [0, 64], sizes = [8, 64], strides = [1, 1]} : vector<8x128xf32> to vector<8x64xf32>
    %188 = vector.extract_strided_slice %179 {offsets = [0, 128], sizes = [8, 64], strides = [1, 1]} : vector<8x256xf32> to vector<8x64xf32>
    %189 = math.tanh %188 : vector<8x64xf32>
    %190 = vector.extract_strided_slice %179 {offsets = [0, 192], sizes = [8, 64], strides = [1, 1]} : vector<8x256xf32> to vector<8x64xf32>
    %191 = arith.negf %190 : vector<8x64xf32>
    %192 = math.exp %191 : vector<8x64xf32>
    %cst_58 = arith.constant 1.000000e+00 : f32
    %193 = vector.broadcast %cst_58 : f32 to vector<8x64xf32>
    %194 = arith.addf %193, %192 : vector<8x64xf32>
    %195 = arith.divf %193, %194 : vector<8x64xf32>
    %196 = arith.mulf %187, %172 : vector<8x64xf32>
    %197 = arith.mulf %186, %189 : vector<8x64xf32>
    %198 = arith.addf %196, %197 : vector<8x64xf32>
    %199 = math.tanh %198 : vector<8x64xf32>
    %200 = arith.mulf %195, %199 : vector<8x64xf32>
    %201 = vector.extract_strided_slice %200 {offsets = [0, 32], sizes = [8, 32], strides = [1, 1]} : vector<8x64xf32> to vector<8x32xf32>
    %c40_59 = arith.constant 40 : index
    %c0_60 = arith.constant 0 : index
    %202 = vector.load %arg13[%c40_59, %c0_60] : memref<64x32xf32, #tpu.memory_space<vmem>>, vector<8x32xf32>
    tpu.vector_store %arg13[%c40_59, %c0_60], %201 {strides = array<i32>} : memref<64x32xf32, #tpu.memory_space<vmem>>, vector<8x32xf32>,
    %c56 = arith.constant 56 : index
    %c0_61 = arith.constant 0 : index
    %203 = vector.load %arg12[%c56, %c0_61] : memref<72x256xf32, #tpu.memory_space<vmem>>, vector<8x256xf32>
    %cst_62 = arith.constant dense<0.000000e+00> : vector<8x256xf32>
    %204 = tpu.matmul %200, %7, %cst_62 {dimension_numbers = #tpu.dot_dimension_numbers<[1], [0], [0], [1], [0, 0, 1, 1], [], []>} : vector<8x64xf32>, vector<64x256xf32>, vector<8x256xf32> -> vector<8x256xf32>
    %205 = arith.addf %203, %204 : vector<8x256xf32>
    %206 = vector.extract_strided_slice %205 {offsets = [0, 0], sizes = [8, 128], strides = [1, 1]} : vector<8x256xf32> to vector<8x128xf32>
    %207 = arith.negf %206 : vector<8x128xf32>
    %208 = math.exp %207 : vector<8x128xf32>
    %cst_63 = arith.constant 1.000000e+00 : f32
    %209 = vector.broadcast %cst_63 : f32 to vector<8x128xf32>
    %210 = arith.addf %209, %208 : vector<8x128xf32>
    %211 = arith.divf %209, %210 : vector<8x128xf32>
    %212 = vector.extract_strided_slice %211 {offsets = [0, 0], sizes = [8, 64], strides = [1, 1]} : vector<8x128xf32> to vector<8x64xf32>
    %213 = vector.extract_strided_slice %211 {offsets = [0, 64], sizes = [8, 64], strides = [1, 1]} : vector<8x128xf32> to vector<8x64xf32>
    %214 = vector.extract_strided_slice %205 {offsets = [0, 128], sizes = [8, 64], strides = [1, 1]} : vector<8x256xf32> to vector<8x64xf32>
    %215 = math.tanh %214 : vector<8x64xf32>
    %216 = vector.extract_strided_slice %205 {offsets = [0, 192], sizes = [8, 64], strides = [1, 1]} : vector<8x256xf32> to vector<8x64xf32>
    %217 = arith.negf %216 : vector<8x64xf32>
    %218 = math.exp %217 : vector<8x64xf32>
    %cst_64 = arith.constant 1.000000e+00 : f32
    %219 = vector.broadcast %cst_64 : f32 to vector<8x64xf32>
    %220 = arith.addf %219, %218 : vector<8x64xf32>
    %221 = arith.divf %219, %220 : vector<8x64xf32>
    %222 = arith.mulf %213, %198 : vector<8x64xf32>
    %223 = arith.mulf %212, %215 : vector<8x64xf32>
    %224 = arith.addf %222, %223 : vector<8x64xf32>
    %225 = math.tanh %224 : vector<8x64xf32>
    %226 = arith.mulf %221, %225 : vector<8x64xf32>
    %227 = vector.extract_strided_slice %226 {offsets = [0, 32], sizes = [8, 32], strides = [1, 1]} : vector<8x64xf32> to vector<8x32xf32>
    %c48_65 = arith.constant 48 : index
    %c0_66 = arith.constant 0 : index
    %228 = vector.load %arg13[%c48_65, %c0_66] : memref<64x32xf32, #tpu.memory_space<vmem>>, vector<8x32xf32>
    tpu.vector_store %arg13[%c48_65, %c0_66], %227 {strides = array<i32>} : memref<64x32xf32, #tpu.memory_space<vmem>>, vector<8x32xf32>,
    %c64 = arith.constant 64 : index
    %c0_67 = arith.constant 0 : index
    %229 = vector.load %arg12[%c64, %c0_67] : memref<72x256xf32, #tpu.memory_space<vmem>>, vector<8x256xf32>
    %cst_68 = arith.constant dense<0.000000e+00> : vector<8x256xf32>
    %230 = tpu.matmul %226, %7, %cst_68 {dimension_numbers = #tpu.dot_dimension_numbers<[1], [0], [0], [1], [0, 0, 1, 1], [], []>} : vector<8x64xf32>, vector<64x256xf32>, vector<8x256xf32> -> vector<8x256xf32>
    %231 = arith.addf %229, %230 : vector<8x256xf32>
    %232 = vector.extract_strided_slice %231 {offsets = [0, 0], sizes = [8, 128], strides = [1, 1]} : vector<8x256xf32> to vector<8x128xf32>
    %233 = arith.negf %232 : vector<8x128xf32>
    %234 = math.exp %233 : vector<8x128xf32>
    %cst_69 = arith.constant 1.000000e+00 : f32
    %235 = vector.broadcast %cst_69 : f32 to vector<8x128xf32>
    %236 = arith.addf %235, %234 : vector<8x128xf32>
    %237 = arith.divf %235, %236 : vector<8x128xf32>
    %238 = vector.extract_strided_slice %237 {offsets = [0, 0], sizes = [8, 64], strides = [1, 1]} : vector<8x128xf32> to vector<8x64xf32>
    %239 = vector.extract_strided_slice %237 {offsets = [0, 64], sizes = [8, 64], strides = [1, 1]} : vector<8x128xf32> to vector<8x64xf32>
    %240 = vector.extract_strided_slice %231 {offsets = [0, 128], sizes = [8, 64], strides = [1, 1]} : vector<8x256xf32> to vector<8x64xf32>
    %241 = math.tanh %240 : vector<8x64xf32>
    %242 = vector.extract_strided_slice %231 {offsets = [0, 192], sizes = [8, 64], strides = [1, 1]} : vector<8x256xf32> to vector<8x64xf32>
    %243 = arith.negf %242 : vector<8x64xf32>
    %244 = math.exp %243 : vector<8x64xf32>
    %cst_70 = arith.constant 1.000000e+00 : f32
    %245 = vector.broadcast %cst_70 : f32 to vector<8x64xf32>
    %246 = arith.addf %245, %244 : vector<8x64xf32>
    %247 = arith.divf %245, %246 : vector<8x64xf32>
    %248 = arith.mulf %239, %224 : vector<8x64xf32>
    %249 = arith.mulf %238, %241 : vector<8x64xf32>
    %250 = arith.addf %248, %249 : vector<8x64xf32>
    %251 = math.tanh %250 : vector<8x64xf32>
    %252 = arith.mulf %247, %251 : vector<8x64xf32>
    %253 = arith.select %20, %224, %250 : vector<8x64xi1>, vector<8x64xf32>
    %254 = arith.select %20, %226, %252 : vector<8x64xi1>, vector<8x64xf32>
    %255 = vector.extract_strided_slice %254 {offsets = [0, 32], sizes = [8, 32], strides = [1, 1]} : vector<8x64xf32> to vector<8x32xf32>
    %c56_71 = arith.constant 56 : index
    %c0_72 = arith.constant 0 : index
    %256 = vector.load %arg13[%c56_71, %c0_72] : memref<64x32xf32, #tpu.memory_space<vmem>>, vector<8x32xf32>
    tpu.vector_store %arg13[%c56_71, %c0_72], %255 {strides = array<i32>} : memref<64x32xf32, #tpu.memory_space<vmem>>, vector<8x32xf32>,
    %257 = vector.extract_strided_slice %254 {offsets = [0, 0], sizes = [8, 32], strides = [1, 1]} : vector<8x64xf32> to vector<8x32xf32>
    %c0_73 = arith.constant 0 : index
    %c0_74 = arith.constant 0 : index
    %c0_75 = arith.constant 0 : index
    %258 = vector.load %arg10[%c0_73, %c0_74, %c0_75] : memref<2x8x32xf32, #tpu.memory_space<vmem>>, vector<1x8x32xf32>
    %259 = vector.shape_cast %258 : vector<1x8x32xf32> to vector<8x32xf32>
    %260 = vector.shape_cast %257 : vector<8x32xf32> to vector<1x8x32xf32>
    tpu.vector_store %arg10[%c0_73, %c0_74, %c0_75], %260 {strides = array<i32>} : memref<2x8x32xf32, #tpu.memory_space<vmem>>, vector<1x8x32xf32>,
    %261 = vector.extract_strided_slice %254 {offsets = [0, 32], sizes = [8, 32], strides = [1, 1]} : vector<8x64xf32> to vector<8x32xf32>
    %c1_76 = arith.constant 1 : index
    %c0_77 = arith.constant 0 : index
    %c0_78 = arith.constant 0 : index
    %262 = vector.load %arg10[%c1_76, %c0_77, %c0_78] : memref<2x8x32xf32, #tpu.memory_space<vmem>>, vector<1x8x32xf32>
    %263 = vector.shape_cast %262 : vector<1x8x32xf32> to vector<8x32xf32>
    %264 = vector.shape_cast %261 : vector<8x32xf32> to vector<1x8x32xf32>
    tpu.vector_store %arg10[%c1_76, %c0_77, %c0_78], %264 {strides = array<i32>} : memref<2x8x32xf32, #tpu.memory_space<vmem>>, vector<1x8x32xf32>,
    %265 = vector.extract_strided_slice %253 {offsets = [0, 0], sizes = [8, 32], strides = [1, 1]} : vector<8x64xf32> to vector<8x32xf32>
    %c0_79 = arith.constant 0 : index
    %c0_80 = arith.constant 0 : index
    %c0_81 = arith.constant 0 : index
    %266 = vector.load %arg11[%c0_79, %c0_80, %c0_81] : memref<2x8x32xf32, #tpu.memory_space<vmem>>, vector<1x8x32xf32>
    %267 = vector.shape_cast %266 : vector<1x8x32xf32> to vector<8x32xf32>
    %268 = vector.shape_cast %265 : vector<8x32xf32> to vector<1x8x32xf32>
    tpu.vector_store %arg11[%c0_79, %c0_80, %c0_81], %268 {strides = array<i32>} : memref<2x8x32xf32, #tpu.memory_space<vmem>>, vector<1x8x32xf32>,
    %269 = vector.extract_strided_slice %253 {offsets = [0, 32], sizes = [8, 32], strides = [1, 1]} : vector<8x64xf32> to vector<8x32xf32>
    %c1_82 = arith.constant 1 : index
    %c0_83 = arith.constant 0 : index
    %c0_84 = arith.constant 0 : index
    %270 = vector.load %arg11[%c1_82, %c0_83, %c0_84] : memref<2x8x32xf32, #tpu.memory_space<vmem>>, vector<1x8x32xf32>
    %271 = vector.shape_cast %270 : vector<1x8x32xf32> to vector<8x32xf32>
    %272 = vector.shape_cast %269 : vector<8x32xf32> to vector<1x8x32xf32>
    tpu.vector_store %arg11[%c1_82, %c0_83, %c0_84], %272 {strides = array<i32>} : memref<2x8x32xf32, #tpu.memory_space<vmem>>, vector<1x8x32xf32>,
    %c0_85 = arith.constant 0 : index
    %c0_86 = arith.constant 0 : index
    %273 = vector.load %arg13[%c0_85, %c0_86] : memref<64x32xf32, #tpu.memory_space<vmem>>, vector<64x32xf32>
    %c0_87 = arith.constant 0 : index
    %c0_88 = arith.constant 0 : index
    %274 = vector.load %arg7[%c0_87, %c0_88] : memref<32x32xf32, #tpu.memory_space<vmem>>, vector<32x32xf32>
    %cst_89 = arith.constant dense<0.000000e+00> : vector<64x32xf32>
    %275 = tpu.matmul %273, %274, %cst_89 {dimension_numbers = #tpu.dot_dimension_numbers<[1], [0], [0], [1], [0, 0, 1, 1], [], []>} : vector<64x32xf32>, vector<32x32xf32>, vector<64x32xf32> -> vector<64x32xf32>
    %c0_90 = arith.constant 0 : index
    %c0_91 = arith.constant 0 : index
    %276 = vector.load %arg8[%c0_90, %c0_91] : memref<1x32xf32, #tpu.memory_space<vmem>>, vector<1x32xf32>
    %277 = vector.broadcast %276 : vector<1x32xf32> to vector<64x32xf32>
    %278 = arith.addf %275, %277 : vector<64x32xf32>
    %279 = tpu.iota {dimensions = array<i32: 1>} : vector<64x32xi32>
    %c16_i32 = arith.constant 16 : i32
    %280 = vector.broadcast %c16_i32 : i32 to vector<64x32xi32>
    %281 = arith.cmpi slt, %279, %280 : vector<64x32xi32>
    %282 = arith.negf %278 : vector<64x32xf32>
    %283 = math.exp %282 : vector<64x32xf32>
    %cst_92 = arith.constant 1.000000e+00 : f32
    %284 = vector.broadcast %cst_92 : f32 to vector<64x32xf32>
    %285 = arith.addf %284, %283 : vector<64x32xf32>
    %286 = arith.divf %284, %285 : vector<64x32xf32>
    %287 = arith.select %281, %278, %286 : vector<64x32xi1>, vector<64x32xf32>
    %c0_93 = arith.constant 0 : index
    %c0_94 = arith.constant 0 : index
    %288 = vector.load %arg9[%c0_93, %c0_94] : memref<64x32xf32, #tpu.memory_space<vmem>>, vector<64x32xf32>
    tpu.vector_store %arg9[%c0_93, %c0_94], %287 {strides = array<i32>} : memref<64x32xf32, #tpu.memory_space<vmem>>, vector<64x32xf32>,
    return
  }
  func.func @transform_0(%arg0: i32) -> (i32, i32) {
    %c0_i32 = arith.constant 0 : i32
    %c0_i32_0 = arith.constant 0 : i32
    %c0_i32_1 = arith.constant 0 : i32
    return %c0_i32, %c0_i32_0 : i32, i32
  }
  func.func @transform_1(%arg0: i32) -> (i32, i32, i32) {
    %c0_i32 = arith.constant 0 : i32
    %c0_i32_0 = arith.constant 0 : i32
    %c0_i32_1 = arith.constant 0 : i32
    %c0_i32_2 = arith.constant 0 : i32
    return %c0_i32, %c0_i32_0, %c0_i32_1 : i32, i32, i32
  }
  func.func @transform_2(%arg0: i32) -> (i32, i32, i32) {
    %c0_i32 = arith.constant 0 : i32
    %c0_i32_0 = arith.constant 0 : i32
    %c0_i32_1 = arith.constant 0 : i32
    %c0_i32_2 = arith.constant 0 : i32
    return %c0_i32, %c0_i32_0, %c0_i32_1 : i32, i32, i32
  }
  func.func @transform_3(%arg0: i32) -> (i32, i32) {
    %c0_i32 = arith.constant 0 : i32
    %c0_i32_0 = arith.constant 0 : i32
    %c0_i32_1 = arith.constant 0 : i32
    return %c0_i32, %c0_i32_0 : i32, i32
  }
  func.func @transform_4(%arg0: i32) -> (i32, i32) {
    %c0_i32 = arith.constant 0 : i32
    %c0_i32_0 = arith.constant 0 : i32
    %c0_i32_1 = arith.constant 0 : i32
    return %c0_i32, %c0_i32_0 : i32, i32
  }
  func.func @transform_5(%arg0: i32) -> (i32, i32) {
    %c0_i32 = arith.constant 0 : i32
    %c0_i32_0 = arith.constant 0 : i32
    %c0_i32_1 = arith.constant 0 : i32
    return %c0_i32, %c0_i32_0 : i32, i32
  }
  func.func @transform_6(%arg0: i32) -> (i32, i32) {
    %c0_i32 = arith.constant 0 : i32
    %c0_i32_0 = arith.constant 0 : i32
    %c0_i32_1 = arith.constant 0 : i32
    return %c0_i32, %c0_i32_0 : i32, i32
  }
  func.func @transform_7(%arg0: i32) -> (i32, i32) {
    %c0_i32 = arith.constant 0 : i32
    %c0_i32_0 = arith.constant 0 : i32
    %c0_i32_1 = arith.constant 0 : i32
    return %c0_i32, %c0_i32_0 : i32, i32
  }
  func.func @transform_8(%arg0: i32) -> (i32, i32) {
    %c0_i32 = arith.constant 0 : i32
    %c0_i32_0 = arith.constant 0 : i32
    %c0_i32_1 = arith.constant 0 : i32
    return %c0_i32, %c0_i32_0 : i32, i32
  }
  func.func @transform_9(%arg0: i32) -> (i32, i32, i32) {
    %c0_i32 = arith.constant 0 : i32
    %c0_i32_0 = arith.constant 0 : i32
    %c0_i32_1 = arith.constant 0 : i32
    %c0_i32_2 = arith.constant 0 : i32
    return %c0_i32, %c0_i32_0, %c0_i32_1 : i32, i32, i32
  }
  func.func @transform_10(%arg0: i32) -> (i32, i32, i32) {
    %c0_i32 = arith.constant 0 : i32
    %c0_i32_0 = arith.constant 0 : i32
    %c0_i32_1 = arith.constant 0 : i32
    %c0_i32_2 = arith.constant 0 : i32
    return %c0_i32, %c0_i32_0, %c0_i32_1 : i32, i32, i32
  }
}

</mosaic_0001>

<llo_original>
// kernel: policy_net_forward.1
$region0: #{policy_net_forward.1}
  #allocation0 [shape = 'u32[]', space=smem, size = 0x4, offset = 0x4, fixed_abs, tag = 'smem constant byte address 0x4 - core index']
  #allocation1 [shape = 'u32[144,128]{1,0:T(1,128)}', space=vmem, size = 0x12000, scoped, tag = 'internal scratch']
  #allocation2 [shape = 'f32[72,256]{1,0:T(8,128)}', space=vmem, size = 0x12000, scoped, tag = 'scratch operand']
  #allocation3 [shape = 'f32[64,32]{1,0:T(8,128)}', space=vmem, size = 0x8000, scoped, tag = 'scratch operand']
  %s0 = inlined_call_operand.vmem [shape: f32[72,16], index: 0, kind: input, shape index: {}]
  %s1 = inlined_call_operand.vmem [shape: f32[2,8,32], index: 1, kind: input, shape index: {}]
  %s2 = inlined_call_operand.hbm [shape: f32[2,8,32], index: 2, kind: input, shape index: {}]
  %s3 = inlined_call_operand.hbm [shape: f32[16,256], index: 3, kind: input, shape index: {}]
  %s4 = inlined_call_operand.vmem [shape: f32[1,256], index: 4, kind: input, shape index: {}]
  %s5 = inlined_call_operand.vmem [shape: f32[64,256], index: 5, kind: input, shape index: {}]
  %s6 = inlined_call_operand.hbm [shape: f32[32,32], index: 6, kind: input, shape index: {}]
  %s7 = inlined_call_operand.vmem [shape: f32[1,32], index: 7, kind: input, shape index: {}]
  %s8 = inlined_call_operand.vmem [shape: f32[64,32], index: 8, kind: output, shape index: {0}]
  %s9 = inlined_call_operand.hbm [shape: f32[2,8,32], index: 9, kind: output, shape index: {1}]
  %s10 = inlined_call_operand.hbm [shape: f32[2,8,32], index: 10, kind: output, shape index: {2}]
  %11 = xla_tuple %s8, %s9, %s10
  %s12 = sld [smem:[#allocation0]]
  $region70: #{policy_net_forward.1} parent=0
    _
  %s14 = ssub.s32 1, %s12
  %s15 = scalar_select 0, %s14, %s12
  $region1: #{policy_net_forward.1} parent=0
    #allocation4 [shape = 'u8[8192]{0}', space=vmem, size = 0x2000, scoped, tag = 'input window, operand 2, single buffered']
    #allocation5 [shape = 's32[1]{0}', space=sflag, size = 0x4, scoped, tag = 'scoped memory for policy_net_forward.1']
    #allocation6 [shape = 's32[1]{0}', space=sflag, size = 0x4, scoped, tag = 'scoped memory for policy_net_forward.1']
    #allocation7 [shape = 'u8[16384]{0}', space=vmem, size = 0x4000, scoped, tag = 'input window, operand 3, single buffered']
    #allocation8 [shape = 's32[1]{0}', space=sflag, size = 0x4, scoped, tag = 'scoped memory for policy_net_forward.1']
    #allocation9 [shape = 'u8[16384]{0}', space=vmem, size = 0x4000, scoped, tag = 'input window, operand 6, single buffered']
    #allocation10 [shape = 'u8[8192]{0}', space=vmem, size = 0x2000, scoped, tag = 'output window, operand 1, single buffered']
    #allocation11 [shape = 'u8[8192]{0}', space=vmem, size = 0x2000, scoped, tag = 'output window, operand 2, single buffered']
    #allocation12 [shape = 's32[1]{0}', space=sflag, size = 0x4, scoped, tag = 'scoped memory for policy_net_forward.1']
    %16 = vsyncpa [#allocation5], 0
    %17 = vsyncpa [#allocation8], 0
    %18 = vsyncpa [#allocation6], 0
    %19 = vsyncpa [#allocation12], 0
    // Predicated region
    $region2: #{policy_net_forward.1} parent=1 // pred_check
      _
    $region3: #{policy_net_forward.1} parent=1 // pred_check_branch
      %21 = sbr.rel (0) target = $region5
    $region4: #{policy_net_forward.1} parent=1 // pred_region
      _
    $region5: #{policy_net_forward.1} parent=1 // pred_fallthru
      _
    // Predicated region
    $region6: #{policy_net_forward.1} parent=1 // pred_check
      _
    $region7: #{policy_net_forward.1} parent=1 // pred_check_branch
      %23 = sbr.rel (0) target = $region9
    $region8: #{policy_net_forward.1} parent=1 // pred_region
      _
    $region9: #{policy_net_forward.1} parent=1 // pred_fallthru
      _
    // Predicated region
    $region10: #{policy_net_forward.1} parent=1 // pred_check
      _
    $region11: #{policy_net_forward.1} parent=1 // pred_check_branch
      %25 = sbr.rel (0) target = $region13
    $region12: #{policy_net_forward.1} parent=1 // pred_region
      %s27 = ssub.s32 256, 256
      %28 = vsyncadd [#allocation5], %s27
      %s29 = sshll.u32 [#allocation4], 4
      %s30 = int_to_ptr.vmem [resolvable:$true] %s29
      %35 = dma.hbm_to_vmem [thread:$0]  %s2, 256, %s30, [#allocation5], 128, 128, 8
    $region13: #{policy_net_forward.1} parent=1 // pred_fallthru
      _
    // Predicated region
    $region14: #{policy_net_forward.1} parent=1 // pred_check
      _
    $region15: #{policy_net_forward.1} parent=1 // pred_check_branch
      %37 = sbr.rel (0) target = $region17
    $region16: #{policy_net_forward.1} parent=1 // pred_region
      %s39 = ssub.s32 512, 512
      %40 = vsyncadd [#allocation8], %s39
      %s41 = sshll.u32 [#allocation7], 4
      %s42 = int_to_ptr.vmem [resolvable:$true] %s41
      %47 = dma.hbm_to_vmem [thread:$0]  %s3, 512, %s42, [#allocation8], 256, 256, 16
    $region17: #{policy_net_forward.1} parent=1 // pred_fallthru
      _
    // Predicated region
    $region18: #{policy_net_forward.1} parent=1 // pred_check
      _
    $region19: #{policy_net_forward.1} parent=1 // pred_check_branch
      %49 = sbr.rel (0) target = $region21
    $region20: #{policy_net_forward.1} parent=1 // pred_region
      _
    $region21: #{policy_net_forward.1} parent=1 // pred_fallthru
      _
    // Predicated region
    $region22: #{policy_net_forward.1} parent=1 // pred_check
      _
    $region23: #{policy_net_forward.1} parent=1 // pred_check_branch
      %51 = sbr.rel (0) target = $region25
    $region24: #{policy_net_forward.1} parent=1 // pred_region
      _
    $region25: #{policy_net_forward.1} parent=1 // pred_fallthru
      _
    // Predicated region
    $region26: #{policy_net_forward.1} parent=1 // pred_check
      _
    $region27: #{policy_net_forward.1} parent=1 // pred_check_branch
      %53 = sbr.rel (0) target = $region29
    $region28: #{policy_net_forward.1} parent=1 // pred_region
      %s55 = ssub.s32 512, 512
      %56 = vsyncadd [#allocation8], %s55
      %s57 = sshll.u32 [#allocation9], 4
      %s58 = int_to_ptr.vmem [resolvable:$true] %s57
      %63 = dma.hbm_to_vmem [thread:$0]  %s6, 512, %s58, [#allocation8], 128, 128, 8
    $region29: #{policy_net_forward.1} parent=1 // pred_fallthru
      _
    // Predicated region
    $region30: #{policy_net_forward.1} parent=1 // pred_check
      _
    $region31: #{policy_net_forward.1} parent=1 // pred_check_branch
      %65 = sbr.rel (0) target = $region33
    $region32: #{policy_net_forward.1} parent=1 // pred_region
      _
    $region33: #{policy_net_forward.1} parent=1 // pred_fallthru
      _
    // Predicated region
    $region34: #{policy_net_forward.1} parent=1 // pred_check
      _
    $region35: #{policy_net_forward.1} parent=1 // pred_check_branch
      %67 = sbr.rel (0) target = $region37
    $region36: #{policy_net_forward.1} parent=1 // pred_region
      %68 = dma.done [#allocation5], 256
    $region37: #{policy_net_forward.1} parent=1 // pred_fallthru
      _
    // Predicated region
    $region38: #{policy_net_forward.1} parent=1 // pred_check
      _
    $region39: #{policy_net_forward.1} parent=1 // pred_check_branch
      %70 = sbr.rel (0) target = $region41
    $region40: #{policy_net_forward.1} parent=1 // pred_region
      %71 = dma.done [#allocation8], 512
    $region41: #{policy_net_forward.1} parent=1 // pred_fallthru
      _
    // Predicated region
    $region42: #{policy_net_forward.1} parent=1 // pred_check
      _
    $region43: #{policy_net_forward.1} parent=1 // pred_check_branch
      %73 = sbr.rel (0) target = $region45
    $region44: #{policy_net_forward.1} parent=1 // pred_region
      %74 = dma.done [#allocation8], 512
    $region45: #{policy_net_forward.1} parent=1 // pred_fallthru
      _
    %v75 = vld [vmem:[%s0] sm:$0xff]
    %v76 = vld [vmem:[%s0 + $0x8] sm:$0xff]
    %v77 = vld [vmem:[%s0 + $0x10] sm:$0xff]
    %v78 = vld [vmem:[%s0 + $0x18] sm:$0xff]
    %v79 = vld [vmem:[%s0 + $0x20] sm:$0xff]
    %v80 = vld [vmem:[%s0 + $0x28] sm:$0xff]
    %v81 = vld [vmem:[%s0 + $0x30] sm:$0xff]
    %v82 = vld [vmem:[%s0 + $0x38] sm:$0xff]
    %v83 = vld [vmem:[%s0 + $0x40] sm:$0xff]
    %v84 = vld [vmem:[#allocation7] sm:$0xff]
    %v85 = vld [vmem:[#allocation7 + $0x8] sm:$0xff]
    %v86 = vld [vmem:[#allocation7 + $0x10] sm:$0xff]
    %v87 = vld [vmem:[#allocation7 + $0x18] sm:$0xff]
    %v88 = vld [vmem:[%s4] sm:$0x3]
    %v90 = vlaneseq
    %v91 = vshrl.u32 %v90, 7
    %v92 = vsub.s32 0, %v91
    %v93 = vrot.slane %v88, %v92
    %v94 = vlaneseq
    %v95 = vshrl.u32 %v94, 7
    %v96 = vsub.s32 1, %v95
    %v97 = vrot.slane %v88, %v96
    %vm100 = vcmask 130048
    %v102 = vsel %vm100, %v75, 0
    %v105 = vsel %vm100, %v76, 0
    %v108 = vsel %vm100, %v77, 0
    %v111 = vsel %vm100, %v78, 0
    %v114 = vsel %vm100, %v79, 0
    %v117 = vsel %vm100, %v80, 0
    %v120 = vsel %vm100, %v81, 0
    %v123 = vsel %vm100, %v82, 0
    %v126 = vsel %vm100, %v83, 0
    %128 = vmatprep.subr.mxu0 %v85
    %129 = vmatpush1.msra.mxu0 %v84
    %130 = vmatprep.subr.mxu0 %v87
    %131 = vmatpush1.msra.mxu0 %v86
    %132 = vmatprep.subr.mxu0 0.0
    %133 = vmatpush1.msra.mxu0 0.0
    %134 = vmatprep.subr.mxu0 0.0
    %135 = vmatpush1.msra.mxu0 0.0
    %136 = vmatprep.subr.mxu0 0.0
    %137 = vmatpush1.msra.mxu0 0.0
    %138 = vmatprep.subr.mxu0 0.0
    %139 = vmatpush1.msra.mxu0 0.0
    %140 = vmatprep.subr.mxu0 0.0
    %141 = vmatpush1.msra.mxu0 0.0
    %142 = vmatprep.subr.mxu0 0.0
    %143 = vmatpush1.msra.mxu0 0.0
    %144 = vmatprep.subr.mxu0 0.0
    %145 = vmatpush1.msra.mxu0 0.0
    %146 = vmatprep.subr.mxu0 0.0
    %147 = vmatpush1.msra.mxu0 0.0
    %148 = vmatprep.subr.mxu0 0.0
    %149 = vmatpush1.msra.mxu0 0.0
    %150 = vmatprep.subr.mxu0 0.0
    %151 = vmatpush1.msra.mxu0 0.0
    %152 = vmatprep.subr.mxu0 0.0
    %153 = vmatpush1.msra.mxu0 0.0
    %154 = vmatprep.subr.mxu0 0.0
    %155 = vmatpush1.msra.mxu0 0.0
    %156 = vmatprep.subr.mxu0 0.0
    %157 = vmatpush1.msra.mxu0 0.0
    %158 = vmatprep.subr.mxu0 0.0
    %159 = vmatpush1.msra.mxu0 0.0
    %160 = vmatprep.subr.mxu0 0.0
    %161 = vmatpush1.msra.mxu0 0.0
    %162 = vmatprep.subr.mxu0 0.0
    %163 = vmatpush1.msra.mxu0 0.0
    %164 = vmatprep.subr.mxu0 0.0
    %165 = vmatpush1.msra.mxu0 0.0
    %166 = vmatprep.subr.mxu0 0.0
    %167 = vmatpush1.msra.mxu0 0.0
    %168 = vmatprep.subr.mxu0 0.0
    %169 = vmatpush1.msra.mxu0 0.0
    %170 = vmatprep.subr.mxu0 0.0
    %171 = vmatpush1.msra.mxu0 0.0
    %172 = vmatprep.subr.mxu0 0.0
    %173 = vmatpush1.msra.mxu0 0.0
    %174 = vmatprep.subr.mxu0 0.0
    %175 = vmatpush1.msra.mxu0 0.0
    %176 = vmatprep.subr.mxu0 0.0
    %177 = vmatpush1.msra.mxu0 0.0
    %178 = vmatprep.subr.mxu0 0.0
    %179 = vmatpush1.msra.mxu0 0.0
    %180 = vmatprep.subr.mxu0 0.0
    %181 = vmatpush1.msra.mxu0 0.0
    %182 = vmatprep.subr.mxu0 0.0
    %183 = vmatpush1.msra.mxu0 0.0
    %184 = vmatprep.subr.mxu0 0.0
    %185 = vmatpush1.msra.mxu0 0.0
    %186 = vmatprep.subr.mxu0 0.0
    %187 = vmatpush1.msra.mxu0 0.0
    %188 = vmatprep.subr.mxu0 0.0
    %189 = vmatpush1.msra.mxu0 0.0
    %190 = vmatprep.subr.mxu0 0.0
    %191 = vmatpush1.msra.mxu0 0.0
    %192 = vmatprep.mubr.f32.mxu0 0.0
    %193 = vmatmul.mubr.f32.gmra.mrb[0].mxu0 %v102
    %v194 = vpop.f32.mrb[0].mxu0
    %v195 = vadd.f32 %v93, %v194
    %v196 = vpop.f32.mrb[0].mxu0
    %v197 = vadd.f32 %v97, %v196
    %198 = vmatprep.mubr.f32.mxu0 0.0
    %199 = vmatmul.mubr.f32.gmra.mrb[0].mxu0 %v105
    %v200 = vpop.f32.mrb[0].mxu0
    %v201 = vadd.f32 %v93, %v200
    %v202 = vpop.f32.mrb[0].mxu0
    %v203 = vadd.f32 %v97, %v202
    %204 = vmatprep.mubr.f32.mxu0 0.0
    %205 = vmatmul.mubr.f32.gmra.mrb[0].mxu0 %v108
    %v206 = vpop.f32.mrb[0].mxu0
    %v207 = vadd.f32 %v93, %v206
    %v208 = vpop.f32.mrb[0].mxu0
    %v209 = vadd.f32 %v97, %v208
    %210 = vmatprep.mubr.f32.mxu0 0.0
    %211 = vmatmul.mubr.f32.gmra.mrb[0].mxu0 %v111
    %v212 = vpop.f32.mrb[0].mxu0
    %v213 = vadd.f32 %v93, %v212
    %v214 = vpop.f32.mrb[0].mxu0
    %v215 = vadd.f32 %v97, %v214
    %216 = vmatprep.mubr.f32.mxu0 0.0
    %217 = vmatmul.mubr.f32.gmra.mrb[0].mxu0 %v114
    %v218 = vpop.f32.mrb[0].mxu0
    %v219 = vadd.f32 %v93, %v218
    %v220 = vpop.f32.mrb[0].mxu0
    %v221 = vadd.f32 %v97, %v220
    %222 = vmatprep.mubr.f32.mxu0 0.0
    %223 = vmatmul.mubr.f32.gmra.mrb[0].mxu0 %v117
    %v224 = vpop.f32.mrb[0].mxu0
    %v225 = vadd.f32 %v93, %v224
    %v226 = vpop.f32.mrb[0].mxu0
    %v227 = vadd.f32 %v97, %v226
    %228 = vmatprep.mubr.f32.mxu0 0.0
    %229 = vmatmul.mubr.f32.gmra.mrb[0].mxu0 %v120
    %v230 = vpop.f32.mrb[0].mxu0
    %v231 = vadd.f32 %v93, %v230
    %v232 = vpop.f32.mrb[0].mxu0
    %v233 = vadd.f32 %v97, %v232
    %234 = vmatprep.mubr.f32.mxu0 0.0
    %235 = vmatmul.mubr.f32.gmra.mrb[0].mxu0 %v123
    %v236 = vpop.f32.mrb[0].mxu0
    %v237 = vadd.f32 %v93, %v236
    %v238 = vpop.f32.mrb[0].mxu0
    %v239 = vadd.f32 %v97, %v238
    %240 = vmatprep.mubr.f32.mxu0 0.0
    %241 = vmatmul.mubr.f32.gmra.mrb[0].mxu0 %v126
    %v242 = vpop.f32.mrb[0].mxu0
    %v243 = vadd.f32 %v93, %v242
    %v244 = vpop.f32.mrb[0].mxu0
    %v245 = vadd.f32 %v97, %v244
    %246 = vdwg.mxu0
    %247 = vst [vmem:[#allocation2] sm:$0xff] %v195
    %248 = vst [vmem:[#allocation2 + $0x8] sm:$0xff] %v197
    %249 = vst [vmem:[#allocation2 + $0x10] sm:$0xff] %v201
    %250 = vst [vmem:[#allocation2 + $0x18] sm:$0xff] %v203
    %251 = vst [vmem:[#allocation2 + $0x20] sm:$0xff] %v207
    %252 = vst [vmem:[#allocation2 + $0x28] sm:$0xff] %v209
    %253 = vst [vmem:[#allocation2 + $0x30] sm:$0xff] %v213
    %254 = vst [vmem:[#allocation2 + $0x38] sm:$0xff] %v215
    %255 = vst [vmem:[#allocation2 + $0x40] sm:$0xff] %v219
    %256 = vst [vmem:[#allocation2 + $0x48] sm:$0xff] %v221
    %257 = vst [vmem:[#allocation2 + $0x50] sm:$0xff] %v225
    %258 = vst [vmem:[#allocation2 + $0x58] sm:$0xff] %v227
    %259 = vst [vmem:[#allocation2 + $0x60] sm:$0xff] %v231
    %260 = vst [vmem:[#allocation2 + $0x68] sm:$0xff] %v233
    %261 = vst [vmem:[#allocation2 + $0x70] sm:$0xff] %v237
    %262 = vst [vmem:[#allocation2 + $0x78] sm:$0xff] %v239
    %263 = vst [vmem:[#allocation2 + $0x80] sm:$0xff] %v243
    %264 = vst [vmem:[#allocation2 + $0x88] sm:$0xff] %v245
    %v265 = vld [vmem:[%s5] sm:$0xff]
    %v266 = vld [vmem:[%s5 + $0x8] sm:$0xff]
    %v267 = vld [vmem:[%s5 + $0x10] sm:$0xff]
    %v268 = vld [vmem:[%s5 + $0x18] sm:$0xff]
    %v269 = vld [vmem:[%s5 + $0x20] sm:$0xff]
    %v270 = vld [vmem:[%s5 + $0x28] sm:$0xff]
    %v271 = vld [vmem:[%s5 + $0x30] sm:$0xff]
    %v272 = vld [vmem:[%s5 + $0x38] sm:$0xff]
    %v273 = vld [vmem:[%s5 + $0x40] sm:$0xff]
    %v274 = vld [vmem:[%s5 + $0x48] sm:$0xff]
    %v275 = vld [vmem:[%s5 + $0x50] sm:$0xff]
    %v276 = vld [vmem:[%s5 + $0x58] sm:$0xff]
    %v277 = vld [vmem:[%s5 + $0x60] sm:$0xff]
    %v278 = vld [vmem:[%s5 + $0x68] sm:$0xff]
    %v279 = vld [vmem:[%s5 + $0x70] sm:$0xff]
    %v280 = vld [vmem:[%s5 + $0x78] sm:$0xff]
    %v281 = vld [vmem:[%s1] sm:$0xff]
    %s282 = scalar_lea.vmem %s1, 8
    %v283 = vld [vmem:[%s282] sm:$0xff]
    %285 = vrot.lane.b32.xlu0 %v283, 32
    %v286 = vpop.permute.xlu0 %285
    %vm288 = vcmask 261120
    %v289 = vsel %vm288, %v281, %v286
    %v290 = vld [vmem:[#allocation4] sm:$0xff]
    %s291 = scalar_lea.vmem [#allocation4], 8
    %v292 = vld [vmem:[%s291] sm:$0xff]
    %294 = vrot.lane.b32.xlu0 %v292, 32
    %v295 = vpop.permute.xlu0 %294
    %v297 = vsel %vm288, %v290, %v295
    %v298 = vlaneseq
    %v299 = vand.u32 %v298, 127
    %vm300 = vcmp.lt.s32.totalorder %v299, 32
    %v301 = vld [vmem:[#allocation2] sm:$0xff]
    %v302 = vld [vmem:[#allocation2 + $0x8] sm:$0xff]
    %vm303 = vcmask 523264
    %v305 = vsel %vm303, %v289, 0
    %307 = vmatprep.subr.mxu0 %v266
    %308 = vmatpush1.msra.mxu0 %v265
    %309 = vmatprep.subr.mxu0 %v268
    %310 = vmatpush1.msra.mxu0 %v267
    %311 = vmatprep.subr.mxu0 %v270
    %312 = vmatpush1.msra.mxu0 %v269
    %313 = vmatprep.subr.mxu0 %v272
    %314 = vmatpush1.msra.mxu0 %v271
    %315 = vmatprep.subr.mxu0 %v274
    %316 = vmatpush1.msra.mxu0 %v273
    %317 = vmatprep.subr.mxu0 %v276
    %318 = vmatpush1.msra.mxu0 %v275
    %319 = vmatprep.subr.mxu0 %v278
    %320 = vmatpush1.msra.mxu0 %v277
    %321 = vmatprep.subr.mxu0 %v280
    %322 = vmatpush1.msra.mxu0 %v279
    %323 = vmatprep.subr.mxu0 0.0
    %324 = vmatpush1.msra.mxu0 0.0
    %325 = vmatprep.subr.mxu0 0.0
    %326 = vmatpush1.msra.mxu0 0.0
    %327 = vmatprep.subr.mxu0 0.0
    %328 = vmatpush1.msra.mxu0 0.0
    %329 = vmatprep.subr.mxu0 0.0
    %330 = vmatpush1.msra.mxu0 0.0
    %331 = vmatprep.subr.mxu0 0.0
    %332 = vmatpush1.msra.mxu0 0.0
    %333 = vmatprep.subr.mxu0 0.0
    %334 = vmatpush1.msra.mxu0 0.0
    %335 = vmatprep.subr.mxu0 0.0
    %336 = vmatpush1.msra.mxu0 0.0
    %337 = vmatprep.subr.mxu0 0.0
    %338 = vmatpush1.msra.mxu0 0.0
    %339 = vmatprep.subr.mxu0 0.0
    %340 = vmatpush1.msra.mxu0 0.0
    %341 = vmatprep.subr.mxu0 0.0
    %342 = vmatpush1.msra.mxu0 0.0
    %343 = vmatprep.subr.mxu0 0.0
    %344 = vmatpush1.msra.mxu0 0.0
    %345 = vmatprep.subr.mxu0 0.0
    %346 = vmatpush1.msra.mxu0 0.0
    %347 = vmatprep.subr.mxu0 0.0
    %348 = vmatpush1.msra.mxu0 0.0
    %349 = vmatprep.subr.mxu0 0.0
    %350 = vmatpush1.msra.mxu0 0.0
    %351 = vmatprep.subr.mxu0 0.0
    %352 = vmatpush1.msra.mxu0 0.0
    %353 = vmatprep.subr.mxu0 0.0
    %354 = vmatpush1.msra.mxu0 0.0
    %355 = vmatprep.subr.mxu0 0.0
    %356 = vmatpush1.msra.mxu0 0.0
    %357 = vmatprep.subr.mxu0 0.0
    %358 = vmatpush1.msra.mxu0 0.0
    %359 = vmatprep.subr.mxu0 0.0
    %360 = vmatpush1.msra.mxu0 0.0
    %361 = vmatprep.subr.mxu0 0.0
    %362 = vmatpush1.msra.mxu0 0.0
    %363 = vmatprep.subr.mxu0 0.0
    %364 = vmatpush1.msra.mxu0 0.0
    %365 = vmatprep.subr.mxu0 0.0
    %366 = vmatpush1.msra.mxu0 0.0
    %367 = vmatprep.subr.mxu0 0.0
    %368 = vmatpush1.msra.mxu0 0.0
    %369 = vmatprep.subr.mxu0 0.0
    %370 = vmatpush1.msra.mxu0 0.0
    %371 = vmatprep.mubr.f32.mxu0 0.0
    %372 = vmatmul.mubr.f32.gmra.mrb[0].mxu0 %v305
    %v373 = vpop.f32.mrb[0].mxu0
    %v374 = vadd.f32 0.0, %v373
    %v375 = vpop.f32.mrb[0].mxu0
    %v376 = vadd.f32 0.0, %v375
    %377 = vdwg.mxu0
    %v378 = vadd.f32 %v301, %v374
    %v379 = vadd.f32 %v302, %v376
    %v380 = vxor.u32 %v378, 2147483648
    %v381 = vmul.f32 %v380, 1.442695
    %v382 = vpow.pop %v381
    %v383 = vadd.f32 %v382, 1.0
    %v384 = vrcp.pop %v383
    %v385 = vmul.f32 1.0, %v384
    %v386 = vtanh.pop %v379
    %v387 = vxor.u32 %v379, 2147483648
    %v388 = vmul.f32 %v387, 1.442695
    %v389 = vpow.pop %v388
    %v390 = vadd.f32 %v389, 1.0
    %v391 = vrcp.pop %v390
    %v392 = vmul.f32 1.0, %v391
    %394 = vrot.lane.b32.xlu0 %v297, 64
    %v395 = vpop.permute.xlu0 %394
    %v397 = vmul.f32 %v385, %v395
    %v398 = vmul.f32 %v385, %v386
    %400 = vrot.lane.b32.xlu0 %v398, 64
    %v401 = vpop.permute.xlu0 %400
    %v403 = vadd.f32 %v397, %v401
    %v404 = vtanh.pop %v403
    %v405 = vmul.f32 %v392, %v404
    %407 = vrot.lane.b32.xlu0 %v403, 64
    %v408 = vpop.permute.xlu0 %407
    %v410 = vsel %vm300, %v408, %v297
    %412 = vrot.lane.b32.xlu0 %v405, 64
    %v413 = vpop.permute.xlu0 %412
    %v415 = vsel %vm300, %v413, %v289
    %v416 = vld [vmem:[#allocation2 + $0x10] sm:$0xff]
    %v417 = vld [vmem:[#allocation2 + $0x18] sm:$0xff]
    %v419 = vsel %vm303, %v415, 0
    %421 = vmatprep.subr.mxu0 %v266
    %422 = vmatpush1.msra.mxu0 %v265
    %423 = vmatprep.subr.mxu0 %v268
    %424 = vmatpush1.msra.mxu0 %v267
    %425 = vmatprep.subr.mxu0 %v270
    %426 = vmatpush1.msra.mxu0 %v269
    %427 = vmatprep.subr.mxu0 %v272
    %428 = vmatpush1.msra.mxu0 %v271
    %429 = vmatprep.subr.mxu0 %v274
    %430 = vmatpush1.msra.mxu0 %v273
    %431 = vmatprep.subr.mxu0 %v276
    %432 = vmatpush1.msra.mxu0 %v275
    %433 = vmatprep.subr.mxu0 %v278
    %434 = vmatpush1.msra.mxu0 %v277
    %435 = vmatprep.subr.mxu0 %v280
    %436 = vmatpush1.msra.mxu0 %v279
    %437 = vmatprep.subr.mxu0 0.0
    %438 = vmatpush1.msra.mxu0 0.0
    %439 = vmatprep.subr.mxu0 0.0
    %440 = vmatpush1.msra.mxu0 0.0
    %441 = vmatprep.subr.mxu0 0.0
    %442 = vmatpush1.msra.mxu0 0.0
    %443 = vmatprep.subr.mxu0 0.0
    %444 = vmatpush1.msra.mxu0 0.0
    %445 = vmatprep.subr.mxu0 0.0
    %446 = vmatpush1.msra.mxu0 0.0
    %447 = vmatprep.subr.mxu0 0.0
    %448 = vmatpush1.msra.mxu0 0.0
    %449 = vmatprep.subr.mxu0 0.0
    %450 = vmatpush1.msra.mxu0 0.0
    %451 = vmatprep.subr.mxu0 0.0
    %452 = vmatpush1.msra.mxu0 0.0
    %453 = vmatprep.subr.mxu0 0.0
    %454 = vmatpush1.msra.mxu0 0.0
    %455 = vmatprep.subr.mxu0 0.0
    %456 = vmatpush1.msra.mxu0 0.0
    %457 = vmatprep.subr.mxu0 0.0
    %458 = vmatpush1.msra.mxu0 0.0
    %459 = vmatprep.subr.mxu0 0.0
    %460 = vmatpush1.msra.mxu0 0.0
    %461 = vmatprep.subr.mxu0 0.0
    %462 = vmatpush1.msra.mxu0 0.0
    %463 = vmatprep.subr.mxu0 0.0
    %464 = vmatpush1.msra.mxu0 0.0
    %465 = vmatprep.subr.mxu0 0.0
    %466 = vmatpush1.msra.mxu0 0.0
    %467 = vmatprep.subr.mxu0 0.0
    %468 = vmatpush1.msra.mxu0 0.0
    %469 = vmatprep.subr.mxu0 0.0
    %470 = vmatpush1.msra.mxu0 0.0
    %471 = vmatprep.subr.mxu0 0.0
    %472 = vmatpush1.msra.mxu0 0.0
    %473 = vmatprep.subr.mxu0 0.0
    %474 = vmatpush1.msra.mxu0 0.0
    %475 = vmatprep.subr.mxu0 0.0
    %476 = vmatpush1.msra.mxu0 0.0
    %477 = vmatprep.subr.mxu0 0.0
    %478 = vmatpush1.msra.mxu0 0.0
    %479 = vmatprep.subr.mxu0 0.0
    %480 = vmatpush1.msra.mxu0 0.0
    %481 = vmatprep.subr.mxu0 0.0
    %482 = vmatpush1.msra.mxu0 0.0
    %483 = vmatprep.subr.mxu0 0.0
    %484 = vmatpush1.msra.mxu0 0.0
    %485 = vmatprep.mubr.f32.mxu0 0.0
    %486 = vmatmul.mubr.f32.gmra.mrb[0].mxu0 %v419
    %v487 = vpop.f32.mrb[0].mxu0
    %v488 = vadd.f32 0.0, %v487
    %v489 = vpop.f32.mrb[0].mxu0
    %v490 = vadd.f32 0.0, %v489
    %491 = vdwg.mxu0
    %v492 = vadd.f32 %v416, %v488
    %v493 = vadd.f32 %v417, %v490
    %v494 = vxor.u32 %v492, 2147483648
    %v495 = vmul.f32 %v494, 1.442695
    %v496 = vpow.pop %v495
    %v497 = vadd.f32 %v496, 1.0
    %v498 = vrcp.pop %v497
    %v499 = vmul.f32 1.0, %v498
    %v500 = vtanh.pop %v493
    %v501 = vxor.u32 %v493, 2147483648
    %v502 = vmul.f32 %v501, 1.442695
    %v503 = vpow.pop %v502
    %v504 = vadd.f32 %v503, 1.0
    %v505 = vrcp.pop %v504
    %v506 = vmul.f32 1.0, %v505
    %508 = vrot.lane.b32.xlu0 %v410, 64
    %v509 = vpop.permute.xlu0 %508
    %v511 = vmul.f32 %v499, %v509
    %v512 = vmul.f32 %v499, %v500
    %514 = vrot.lane.b32.xlu0 %v512, 64
    %v515 = vpop.permute.xlu0 %514
    %v517 = vadd.f32 %v511, %v515
    %v518 = vtanh.pop %v517
    %v519 = vmul.f32 %v506, %v518
    %521 = vrot.lane.b32.xlu0 %v519, 32
    %v522 = vpop.permute.xlu0 %521
    %524 = vst.msk [vmem:[#allocation3] sm:$0xff] %vm288, %v522
    %v525 = vld [vmem:[#allocation2 + $0x20] sm:$0xff]
    %v526 = vld [vmem:[#allocation2 + $0x28] sm:$0xff]
    %527 = vrot.lane.b32.xlu0 %v519, 64
    %v528 = vpop.permute.xlu0 %527
    %v529 = vsel %vm303, %v528, 0
    %531 = vmatprep.subr.mxu0 %v266
    %532 = vmatpush1.msra.mxu0 %v265
    %533 = vmatprep.subr.mxu0 %v268
    %534 = vmatpush1.msra.mxu0 %v267
    %535 = vmatprep.subr.mxu0 %v270
    %536 = vmatpush1.msra.mxu0 %v269
    %537 = vmatprep.subr.mxu0 %v272
    %538 = vmatpush1.msra.mxu0 %v271
    %539 = vmatprep.subr.mxu0 %v274
    %540 = vmatpush1.msra.mxu0 %v273
    %541 = vmatprep.subr.mxu0 %v276
    %542 = vmatpush1.msra.mxu0 %v275
    %543 = vmatprep.subr.mxu0 %v278
    %544 = vmatpush1.msra.mxu0 %v277
    %545 = vmatprep.subr.mxu0 %v280
    %546 = vmatpush1.msra.mxu0 %v279
    %547 = vmatprep.subr.mxu0 0.0
    %548 = vmatpush1.msra.mxu0 0.0
    %549 = vmatprep.subr.mxu0 0.0
    %550 = vmatpush1.msra.mxu0 0.0
    %551 = vmatprep.subr.mxu0 0.0
    %552 = vmatpush1.msra.mxu0 0.0
    %553 = vmatprep.subr.mxu0 0.0
    %554 = vmatpush1.msra.mxu0 0.0
    %555 = vmatprep.subr.mxu0 0.0
    %556 = vmatpush1.msra.mxu0 0.0
    %557 = vmatprep.subr.mxu0 0.0
    %558 = vmatpush1.msra.mxu0 0.0
    %559 = vmatprep.subr.mxu0 0.0
    %560 = vmatpush1.msra.mxu0 0.0
    %561 = vmatprep.subr.mxu0 0.0
    %562 = vmatpush1.msra.mxu0 0.0
    %563 = vmatprep.subr.mxu0 0.0
    %564 = vmatpush1.msra.mxu0 0.0
    %565 = vmatprep.subr.mxu0 0.0
    %566 = vmatpush1.msra.mxu0 0.0
    %567 = vmatprep.subr.mxu0 0.0
    %568 = vmatpush1.msra.mxu0 0.0
    %569 = vmatprep.subr.mxu0 0.0
    %570 = vmatpush1.msra.mxu0 0.0
    %571 = vmatprep.subr.mxu0 0.0
    %572 = vmatpush1.msra.mxu0 0.0
    %573 = vmatprep.subr.mxu0 0.0
    %574 = vmatpush1.msra.mxu0 0.0
    %575 = vmatprep.subr.mxu0 0.0
    %576 = vmatpush1.msra.mxu0 0.0
    %577 = vmatprep.subr.mxu0 0.0
    %578 = vmatpush1.msra.mxu0 0.0
    %579 = vmatprep.subr.mxu0 0.0
    %580 = vmatpush1.msra.mxu0 0.0
    %581 = vmatprep.subr.mxu0 0.0
    %582 = vmatpush1.msra.mxu0 0.0
    %583 = vmatprep.subr.mxu0 0.0
    %584 = vmatpush1.msra.mxu0 0.0
    %585 = vmatprep.subr.mxu0 0.0
    %586 = vmatpush1.msra.mxu0 0.0
    %587 = vmatprep.subr.mxu0 0.0
    %588 = vmatpush1.msra.mxu0 0.0
    %589 = vmatprep.subr.mxu0 0.0
    %590 = vmatpush1.msra.mxu0 0.0
    %591 = vmatprep.subr.mxu0 0.0
    %592 = vmatpush1.msra.mxu0 0.0
    %593 = vmatprep.subr.mxu0 0.0
    %594 = vmatpush1.msra.mxu0 0.0
    %595 = vmatprep.mubr.f32.mxu0 0.0
    %596 = vmatmul.mubr.f32.gmra.mrb[0].mxu0 %v529
    %v597 = vpop.f32.mrb[0].mxu0
    %v598 = vadd.f32 0.0, %v597
    %v599 = vpop.f32.mrb[0].mxu0
    %v600 = vadd.f32 0.0, %v599
    %601 = vdwg.mxu0
    %v602 = vadd.f32 %v525, %v598
    %v603 = vadd.f32 %v526, %v600
    %v604 = vxor.u32 %v602, 2147483648
    %v605 = vmul.f32 %v604, 1.442695
    %v606 = vpow.pop %v605
    %v607 = vadd.f32 %v606, 1.0
    %v608 = vrcp.pop %v607
    %v609 = vmul.f32 1.0, %v608
    %v610 = vtanh.pop %v603
    %v611 = vxor.u32 %v603, 2147483648
    %v612 = vmul.f32 %v611, 1.442695
    %v613 = vpow.pop %v612
    %v614 = vadd.f32 %v613, 1.0
    %v615 = vrcp.pop %v614
    %v616 = vmul.f32 1.0, %v615
    %v617 = vmul.f32 %v609, %v517
    %v618 = vmul.f32 %v609, %v610
    %620 = vrot.lane.b32.xlu0 %v618, 64
    %v621 = vpop.permute.xlu0 %620
    %v623 = vadd.f32 %v617, %v621
    %v624 = vtanh.pop %v623
    %v625 = vmul.f32 %v616, %v624
    %627 = vrot.lane.b32.xlu0 %v625, 32
    %v628 = vpop.permute.xlu0 %627
    %630 = vst.msk [vmem:[#allocation3 + $0x8] sm:$0xff] %vm288, %v628
    %v631 = vld [vmem:[#allocation2 + $0x30] sm:$0xff]
    %v632 = vld [vmem:[#allocation2 + $0x38] sm:$0xff]
    %633 = vrot.lane.b32.xlu0 %v625, 64
    %v634 = vpop.permute.xlu0 %633
    %v635 = vsel %vm303, %v634, 0
    %637 = vmatprep.subr.mxu0 %v266
    %638 = vmatpush1.msra.mxu0 %v265
    %639 = vmatprep.subr.mxu0 %v268
    %640 = vmatpush1.msra.mxu0 %v267
    %641 = vmatprep.subr.mxu0 %v270
    %642 = vmatpush1.msra.mxu0 %v269
    %643 = vmatprep.subr.mxu0 %v272
    %644 = vmatpush1.msra.mxu0 %v271
    %645 = vmatprep.subr.mxu0 %v274
    %646 = vmatpush1.msra.mxu0 %v273
    %647 = vmatprep.subr.mxu0 %v276
    %648 = vmatpush1.msra.mxu0 %v275
    %649 = vmatprep.subr.mxu0 %v278
    %650 = vmatpush1.msra.mxu0 %v277
    %651 = vmatprep.subr.mxu0 %v280
    %652 = vmatpush1.msra.mxu0 %v279
    %653 = vmatprep.subr.mxu0 0.0
    %654 = vmatpush1.msra.mxu0 0.0
    %655 = vmatprep.subr.mxu0 0.0
    %656 = vmatpush1.msra.mxu0 0.0
    %657 = vmatprep.subr.mxu0 0.0
    %658 = vmatpush1.msra.mxu0 0.0
    %659 = vmatprep.subr.mxu0 0.0
    %660 = vmatpush1.msra.mxu0 0.0
    %661 = vmatprep.subr.mxu0 0.0
    %662 = vmatpush1.msra.mxu0 0.0
    %663 = vmatprep.subr.mxu0 0.0
    %664 = vmatpush1.msra.mxu0 0.0
    %665 = vmatprep.subr.mxu0 0.0
    %666 = vmatpush1.msra.mxu0 0.0
    %667 = vmatprep.subr.mxu0 0.0
    %668 = vmatpush1.msra.mxu0 0.0
    %669 = vmatprep.subr.mxu0 0.0
    %670 = vmatpush1.msra.mxu0 0.0
    %671 = vmatprep.subr.mxu0 0.0
    %672 = vmatpush1.msra.mxu0 0.0
    %673 = vmatprep.subr.mxu0 0.0
    %674 = vmatpush1.msra.mxu0 0.0
    %675 = vmatprep.subr.mxu0 0.0
    %676 = vmatpush1.msra.mxu0 0.0
    %677 = vmatprep.subr.mxu0 0.0
    %678 = vmatpush1.msra.mxu0 0.0
    %679 = vmatprep.subr.mxu0 0.0
    %680 = vmatpush1.msra.mxu0 0.0
    %681 = vmatprep.subr.mxu0 0.0
    %682 = vmatpush1.msra.mxu0 0.0
    %683 = vmatprep.subr.mxu0 0.0
    %684 = vmatpush1.msra.mxu0 0.0
    %685 = vmatprep.subr.mxu0 0.0
    %686 = vmatpush1.msra.mxu0 0.0
    %687 = vmatprep.subr.mxu0 0.0
    %688 = vmatpush1.msra.mxu0 0.0
    %689 = vmatprep.subr.mxu0 0.0
    %690 = vmatpush1.msra.mxu0 0.0
    %691 = vmatprep.subr.mxu0 0.0
    %692 = vmatpush1.msra.mxu0 0.0
    %693 = vmatprep.subr.mxu0 0.0
    %694 = vmatpush1.msra.mxu0 0.0
    %695 = vmatprep.subr.mxu0 0.0
    %696 = vmatpush1.msra.mxu0 0.0
    %697 = vmatprep.subr.mxu0 0.0
    %698 = vmatpush1.msra.mxu0 0.0
    %699 = vmatprep.subr.mxu0 0.0
    %700 = vmatpush1.msra.mxu0 0.0
    %701 = vmatprep.mubr.f32.mxu0 0.0
    %702 = vmatmul.mubr.f32.gmra.mrb[0].mxu0 %v635
    %v703 = vpop.f32.mrb[0].mxu0
    %v704 = vadd.f32 0.0, %v703
    %v705 = vpop.f32.mrb[0].mxu0
    %v706 = vadd.f32 0.0, %v705
    %707 = vdwg.mxu0
    %v708 = vadd.f32 %v631, %v704
    %v709 = vadd.f32 %v632, %v706
    %v710 = vxor.u32 %v708, 2147483648
    %v711 = vmul.f32 %v710, 1.442695
    %v712 = vpow.pop %v711
    %v713 = vadd.f32 %v712, 1.0
    %v714 = vrcp.pop %v713
    %v715 = vmul.f32 1.0, %v714
    %v716 = vtanh.pop %v709
    %v717 = vxor.u32 %v709, 2147483648
    %v718 = vmul.f32 %v717, 1.442695
    %v719 = vpow.pop %v718
    %v720 = vadd.f32 %v719, 1.0
    %v721 = vrcp.pop %v720
    %v722 = vmul.f32 1.0, %v721
    %v723 = vmul.f32 %v715, %v623
    %v724 = vmul.f32 %v715, %v716
    %726 = vrot.lane.b32.xlu0 %v724, 64
    %v727 = vpop.permute.xlu0 %726
    %v729 = vadd.f32 %v723, %v727
    %v730 = vtanh.pop %v729
    %v731 = vmul.f32 %v722, %v730
    %733 = vrot.lane.b32.xlu0 %v731, 32
    %v734 = vpop.permute.xlu0 %733
    %736 = vst.msk [vmem:[#allocation3 + $0x10] sm:$0xff] %vm288, %v734
    %v737 = vld [vmem:[#allocation2 + $0x40] sm:$0xff]
    %v738 = vld [vmem:[#allocation2 + $0x48] sm:$0xff]
    %739 = vrot.lane.b32.xlu0 %v731, 64
    %v740 = vpop.permute.xlu0 %739
    %v741 = vsel %vm303, %v740, 0
    %743 = vmatprep.subr.mxu0 %v266
    %744 = vmatpush1.msra.mxu0 %v265
    %745 = vmatprep.subr.mxu0 %v268
    %746 = vmatpush1.msra.mxu0 %v267
    %747 = vmatprep.subr.mxu0 %v270
    %748 = vmatpush1.msra.mxu0 %v269
    %749 = vmatprep.subr.mxu0 %v272
    %750 = vmatpush1.msra.mxu0 %v271
    %751 = vmatprep.subr.mxu0 %v274
    %752 = vmatpush1.msra.mxu0 %v273
    %753 = vmatprep.subr.mxu0 %v276
    %754 = vmatpush1.msra.mxu0 %v275
    %755 = vmatprep.subr.mxu0 %v278
    %756 = vmatpush1.msra.mxu0 %v277
    %757 = vmatprep.subr.mxu0 %v280
    %758 = vmatpush1.msra.mxu0 %v279
    %759 = vmatprep.subr.mxu0 0.0
    %760 = vmatpush1.msra.mxu0 0.0
    %761 = vmatprep.subr.mxu0 0.0
    %762 = vmatpush1.msra.mxu0 0.0
    %763 = vmatprep.subr.mxu0 0.0
    %764 = vmatpush1.msra.mxu0 0.0
    %765 = vmatprep.subr.mxu0 0.0
    %766 = vmatpush1.msra.mxu0 0.0
    %767 = vmatprep.subr.mxu0 0.0
    %768 = vmatpush1.msra.mxu0 0.0
    %769 = vmatprep.subr.mxu0 0.0
    %770 = vmatpush1.msra.mxu0 0.0
    %771 = vmatprep.subr.mxu0 0.0
    %772 = vmatpush1.msra.mxu0 0.0
    %773 = vmatprep.subr.mxu0 0.0
    %774 = vmatpush1.msra.mxu0 0.0
    %775 = vmatprep.subr.mxu0 0.0
    %776 = vmatpush1.msra.mxu0 0.0
    %777 = vmatprep.subr.mxu0 0.0
    %778 = vmatpush1.msra.mxu0 0.0
    %779 = vmatprep.subr.mxu0 0.0
    %780 = vmatpush1.msra.mxu0 0.0
    %781 = vmatprep.subr.mxu0 0.0
    %782 = vmatpush1.msra.mxu0 0.0
    %783 = vmatprep.subr.mxu0 0.0
    %784 = vmatpush1.msra.mxu0 0.0
    %785 = vmatprep.subr.mxu0 0.0
    %786 = vmatpush1.msra.mxu0 0.0
    %787 = vmatprep.subr.mxu0 0.0
    %788 = vmatpush1.msra.mxu0 0.0
    %789 = vmatprep.subr.mxu0 0.0
    %790 = vmatpush1.msra.mxu0 0.0
    %791 = vmatprep.subr.mxu0 0.0
    %792 = vmatpush1.msra.mxu0 0.0
    %793 = vmatprep.subr.mxu0 0.0
    %794 = vmatpush1.msra.mxu0 0.0
    %795 = vmatprep.subr.mxu0 0.0
    %796 = vmatpush1.msra.mxu0 0.0
    %797 = vmatprep.subr.mxu0 0.0
    %798 = vmatpush1.msra.mxu0 0.0
    %799 = vmatprep.subr.mxu0 0.0
    %800 = vmatpush1.msra.mxu0 0.0
    %801 = vmatprep.subr.mxu0 0.0
    %802 = vmatpush1.msra.mxu0 0.0
    %803 = vmatprep.subr.mxu0 0.0
    %804 = vmatpush1.msra.mxu0 0.0
    %805 = vmatprep.subr.mxu0 0.0
    %806 = vmatpush1.msra.mxu0 0.0
    %807 = vmatprep.mubr.f32.mxu0 0.0
    %808 = vmatmul.mubr.f32.gmra.mrb[0].mxu0 %v741
    %v809 = vpop.f32.mrb[0].mxu0
    %v810 = vadd.f32 0.0, %v809
    %v811 = vpop.f32.mrb[0].mxu0
    %v812 = vadd.f32 0.0, %v811
    %813 = vdwg.mxu0
    %v814 = vadd.f32 %v737, %v810
    %v815 = vadd.f32 %v738, %v812
    %v816 = vxor.u32 %v814, 2147483648
    %v817 = vmul.f32 %v816, 1.442695
    %v818 = vpow.pop %v817
    %v819 = vadd.f32 %v818, 1.0
    %v820 = vrcp.pop %v819
    %v821 = vmul.f32 1.0, %v820
    %v822 = vtanh.pop %v815
    %v823 = vxor.u32 %v815, 2147483648
    %v824 = vmul.f32 %v823, 1.442695
    %v825 = vpow.pop %v824
    %v826 = vadd.f32 %v825, 1.0
    %v827 = vrcp.pop %v826
    %v828 = vmul.f32 1.0, %v827
    %v829 = vmul.f32 %v821, %v729
    %v830 = vmul.f32 %v821, %v822
    %832 = vrot.lane.b32.xlu0 %v830, 64
    %v833 = vpop.permute.xlu0 %832
    %v835 = vadd.f32 %v829, %v833
    %v836 = vtanh.pop %v835
    %v837 = vmul.f32 %v828, %v836
    %839 = vrot.lane.b32.xlu0 %v837, 32
    %v840 = vpop.permute.xlu0 %839
    %842 = vst.msk [vmem:[#allocation3 + $0x18] sm:$0xff] %vm288, %v840
    %v843 = vld [vmem:[#allocation2 + $0x50] sm:$0xff]
    %v844 = vld [vmem:[#allocation2 + $0x58] sm:$0xff]
    %845 = vrot.lane.b32.xlu0 %v837, 64
    %v846 = vpop.permute.xlu0 %845
    %v847 = vsel %vm303, %v846, 0
    %849 = vmatprep.subr.mxu0 %v266
    %850 = vmatpush1.msra.mxu0 %v265
    %851 = vmatprep.subr.mxu0 %v268
    %852 = vmatpush1.msra.mxu0 %v267
    %853 = vmatprep.subr.mxu0 %v270
    %854 = vmatpush1.msra.mxu0 %v269
    %855 = vmatprep.subr.mxu0 %v272
    %856 = vmatpush1.msra.mxu0 %v271
    %857 = vmatprep.subr.mxu0 %v274
    %858 = vmatpush1.msra.mxu0 %v273
    %859 = vmatprep.subr.mxu0 %v276
    %860 = vmatpush1.msra.mxu0 %v275
    %861 = vmatprep.subr.mxu0 %v278
    %862 = vmatpush1.msra.mxu0 %v277
    %863 = vmatprep.subr.mxu0 %v280
    %864 = vmatpush1.msra.mxu0 %v279
    %865 = vmatprep.subr.mxu0 0.0
    %866 = vmatpush1.msra.mxu0 0.0
    %867 = vmatprep.subr.mxu0 0.0
    %868 = vmatpush1.msra.mxu0 0.0
    %869 = vmatprep.subr.mxu0 0.0
    %870 = vmatpush1.msra.mxu0 0.0
    %871 = vmatprep.subr.mxu0 0.0
    %872 = vmatpush1.msra.mxu0 0.0
    %873 = vmatprep.subr.mxu0 0.0
    %874 = vmatpush1.msra.mxu0 0.0
    %875 = vmatprep.subr.mxu0 0.0
    %876 = vmatpush1.msra.mxu0 0.0
    %877 = vmatprep.subr.mxu0 0.0
    %878 = vmatpush1.msra.mxu0 0.0
    %879 = vmatprep.subr.mxu0 0.0
    %880 = vmatpush1.msra.mxu0 0.0
    %881 = vmatprep.subr.mxu0 0.0
    %882 = vmatpush1.msra.mxu0 0.0
    %883 = vmatprep.subr.mxu0 0.0
    %884 = vmatpush1.msra.mxu0 0.0
    %885 = vmatprep.subr.mxu0 0.0
    %886 = vmatpush1.msra.mxu0 0.0
    %887 = vmatprep.subr.mxu0 0.0
    %888 = vmatpush1.msra.mxu0 0.0
    %889 = vmatprep.subr.mxu0 0.0
    %890 = vmatpush1.msra.mxu0 0.0
    %891 = vmatprep.subr.mxu0 0.0
    %892 = vmatpush1.msra.mxu0 0.0
    %893 = vmatprep.subr.mxu0 0.0
    %894 = vmatpush1.msra.mxu0 0.0
    %895 = vmatprep.subr.mxu0 0.0
    %896 = vmatpush1.msra.mxu0 0.0
    %897 = vmatprep.subr.mxu0 0.0
    %898 = vmatpush1.msra.mxu0 0.0
    %899 = vmatprep.subr.mxu0 0.0
    %900 = vmatpush1.msra.mxu0 0.0
    %901 = vmatprep.subr.mxu0 0.0
    %902 = vmatpush1.msra.mxu0 0.0
    %903 = vmatprep.subr.mxu0 0.0
    %904 = vmatpush1.msra.mxu0 0.0
    %905 = vmatprep.subr.mxu0 0.0
    %906 = vmatpush1.msra.mxu0 0.0
    %907 = vmatprep.subr.mxu0 0.0
    %908 = vmatpush1.msra.mxu0 0.0
    %909 = vmatprep.subr.mxu0 0.0
    %910 = vmatpush1.msra.mxu0 0.0
    %911 = vmatprep.subr.mxu0 0.0
    %912 = vmatpush1.msra.mxu0 0.0
    %913 = vmatprep.mubr.f32.mxu0 0.0
    %914 = vmatmul.mubr.f32.gmra.mrb[0].mxu0 %v847
    %v915 = vpop.f32.mrb[0].mxu0
    %v916 = vadd.f32 0.0, %v915
    %v917 = vpop.f32.mrb[0].mxu0
    %v918 = vadd.f32 0.0, %v917
    %919 = vdwg.mxu0
    %v920 = vadd.f32 %v843, %v916
    %v921 = vadd.f32 %v844, %v918
    %v922 = vxor.u32 %v920, 2147483648
    %v923 = vmul.f32 %v922, 1.442695
    %v924 = vpow.pop %v923
    %v925 = vadd.f32 %v924, 1.0
    %v926 = vrcp.pop %v925
    %v927 = vmul.f32 1.0, %v926
    %v928 = vtanh.pop %v921
    %v929 = vxor.u32 %v921, 2147483648
    %v930 = vmul.f32 %v929, 1.442695
    %v931 = vpow.pop %v930
    %v932 = vadd.f32 %v931, 1.0
    %v933 = vrcp.pop %v932
    %v934 = vmul.f32 1.0, %v933
    %v935 = vmul.f32 %v927, %v835
    %v936 = vmul.f32 %v927, %v928
    %938 = vrot.lane.b32.xlu0 %v936, 64
    %v939 = vpop.permute.xlu0 %938
    %v941 = vadd.f32 %v935, %v939
    %v942 = vtanh.pop %v941
    %v943 = vmul.f32 %v934, %v942
    %945 = vrot.lane.b32.xlu0 %v943, 32
    %v946 = vpop.permute.xlu0 %945
    %948 = vst.msk [vmem:[#allocation3 + $0x20] sm:$0xff] %vm288, %v946
    %v949 = vld [vmem:[#allocation2 + $0x60] sm:$0xff]
    %v950 = vld [vmem:[#allocation2 + $0x68] sm:$0xff]
    %951 = vrot.lane.b32.xlu0 %v943, 64
    %v952 = vpop.permute.xlu0 %951
    %v953 = vsel %vm303, %v952, 0
    %955 = vmatprep.subr.mxu0 %v266
    %956 = vmatpush1.msra.mxu0 %v265
    %957 = vmatprep.subr.mxu0 %v268
    %958 = vmatpush1.msra.mxu0 %v267
    %959 = vmatprep.subr.mxu0 %v270
    %960 = vmatpush1.msra.mxu0 %v269
    %961 = vmatprep.subr.mxu0 %v272
    %962 = vmatpush1.msra.mxu0 %v271
    %963 = vmatprep.subr.mxu0 %v274
    %964 = vmatpush1.msra.mxu0 %v273
    %965 = vmatprep.subr.mxu0 %v276
    %966 = vmatpush1.msra.mxu0 %v275
    %967 = vmatprep.subr.mxu0 %v278
    %968 = vmatpush1.msra.mxu0 %v277
    %969 = vmatprep.subr.mxu0 %v280
    %970 = vmatpush1.msra.mxu0 %v279
    %971 = vmatprep.subr.mxu0 0.0
    %972 = vmatpush1.msra.mxu0 0.0
    %973 = vmatprep.subr.mxu0 0.0
    %974 = vmatpush1.msra.mxu0 0.0
    %975 = vmatprep.subr.mxu0 0.0
    %976 = vmatpush1.msra.mxu0 0.0
    %977 = vmatprep.subr.mxu0 0.0
    %978 = vmatpush1.msra.mxu0 0.0
    %979 = vmatprep.subr.mxu0 0.0
    %980 = vmatpush1.msra.mxu0 0.0
    %981 = vmatprep.subr.mxu0 0.0
    %982 = vmatpush1.msra.mxu0 0.0
    %983 = vmatprep.subr.mxu0 0.0
    %984 = vmatpush1.msra.mxu0 0.0
    %985 = vmatprep.subr.mxu0 0.0
    %986 = vmatpush1.msra.mxu0 0.0
    %987 = vmatprep.subr.mxu0 0.0
    %988 = vmatpush1.msra.mxu0 0.0
    %989 = vmatprep.subr.mxu0 0.0
    %990 = vmatpush1.msra.mxu0 0.0
    %991 = vmatprep.subr.mxu0 0.0
    %992 = vmatpush1.msra.mxu0 0.0
    %993 = vmatprep.subr.mxu0 0.0
    %994 = vmatpush1.msra.mxu0 0.0
    %995 = vmatprep.subr.mxu0 0.0
    %996 = vmatpush1.msra.mxu0 0.0
    %997 = vmatprep.subr.mxu0 0.0
    %998 = vmatpush1.msra.mxu0 0.0
    %999 = vmatprep.subr.mxu0 0.0
    %1000 = vmatpush1.msra.mxu0 0.0
    %1001 = vmatprep.subr.mxu0 0.0
    %1002 = vmatpush1.msra.mxu0 0.0
    %1003 = vmatprep.subr.mxu0 0.0
    %1004 = vmatpush1.msra.mxu0 0.0
    %1005 = vmatprep.subr.mxu0 0.0
    %1006 = vmatpush1.msra.mxu0 0.0
    %1007 = vmatprep.subr.mxu0 0.0
    %1008 = vmatpush1.msra.mxu0 0.0
    %1009 = vmatprep.subr.mxu0 0.0
    %1010 = vmatpush1.msra.mxu0 0.0
    %1011 = vmatprep.subr.mxu0 0.0
    %1012 = vmatpush1.msra.mxu0 0.0
    %1013 = vmatprep.subr.mxu0 0.0
    %1014 = vmatpush1.msra.mxu0 0.0
    %1015 = vmatprep.subr.mxu0 0.0
    %1016 = vmatpush1.msra.mxu0 0.0
    %1017 = vmatprep.subr.mxu0 0.0
    %1018 = vmatpush1.msra.mxu0 0.0
    %1019 = vmatprep.mubr.f32.mxu0 0.0
    %1020 = vmatmul.mubr.f32.gmra.mrb[0].mxu0 %v953
    %v1021 = vpop.f32.mrb[0].mxu0
    %v1022 = vadd.f32 0.0, %v1021
    %v1023 = vpop.f32.mrb[0].mxu0
    %v1024 = vadd.f32 0.0, %v1023
    %1025 = vdwg.mxu0
    %v1026 = vadd.f32 %v949, %v1022
    %v1027 = vadd.f32 %v950, %v1024
    %v1028 = vxor.u32 %v1026, 2147483648
    %v1029 = vmul.f32 %v1028, 1.442695
    %v1030 = vpow.pop %v1029
    %v1031 = vadd.f32 %v1030, 1.0
    %v1032 = vrcp.pop %v1031
    %v1033 = vmul.f32 1.0, %v1032
    %v1034 = vtanh.pop %v1027
    %v1035 = vxor.u32 %v1027, 2147483648
    %v1036 = vmul.f32 %v1035, 1.442695
    %v1037 = vpow.pop %v1036
    %v1038 = vadd.f32 %v1037, 1.0
    %v1039 = vrcp.pop %v1038
    %v1040 = vmul.f32 1.0, %v1039
    %v1041 = vmul.f32 %v1033, %v941
    %v1042 = vmul.f32 %v1033, %v1034
    %1044 = vrot.lane.b32.xlu0 %v1042, 64
    %v1045 = vpop.permute.xlu0 %1044
    %v1047 = vadd.f32 %v1041, %v1045
    %v1048 = vtanh.pop %v1047
    %v1049 = vmul.f32 %v1040, %v1048
    %1051 = vrot.lane.b32.xlu0 %v1049, 32
    %v1052 = vpop.permute.xlu0 %1051
    %1054 = vst.msk [vmem:[#allocation3 + $0x28] sm:$0xff] %vm288, %v1052
    %v1055 = vld [vmem:[#allocation2 + $0x70] sm:$0xff]
    %v1056 = vld [vmem:[#allocation2 + $0x78] sm:$0xff]
    %1057 = vrot.lane.b32.xlu0 %v1049, 64
    %v1058 = vpop.permute.xlu0 %1057
    %v1059 = vsel %vm303, %v1058, 0
    %1061 = vmatprep.subr.mxu0 %v266
    %1062 = vmatpush1.msra.mxu0 %v265
    %1063 = vmatprep.subr.mxu0 %v268
    %1064 = vmatpush1.msra.mxu0 %v267
    %1065 = vmatprep.subr.mxu0 %v270
    %1066 = vmatpush1.msra.mxu0 %v269
    %1067 = vmatprep.subr.mxu0 %v272
    %1068 = vmatpush1.msra.mxu0 %v271
    %1069 = vmatprep.subr.mxu0 %v274
    %1070 = vmatpush1.msra.mxu0 %v273
    %1071 = vmatprep.subr.mxu0 %v276
    %1072 = vmatpush1.msra.mxu0 %v275
    %1073 = vmatprep.subr.mxu0 %v278
    %1074 = vmatpush1.msra.mxu0 %v277
    %1075 = vmatprep.subr.mxu0 %v280
    %1076 = vmatpush1.msra.mxu0 %v279
    %1077 = vmatprep.subr.mxu0 0.0
    %1078 = vmatpush1.msra.mxu0 0.0
    %1079 = vmatprep.subr.mxu0 0.0
    %1080 = vmatpush1.msra.mxu0 0.0
    %1081 = vmatprep.subr.mxu0 0.0
    %1082 = vmatpush1.msra.mxu0 0.0
    %1083 = vmatprep.subr.mxu0 0.0
    %1084 = vmatpush1.msra.mxu0 0.0
    %1085 = vmatprep.subr.mxu0 0.0
    %1086 = vmatpush1.msra.mxu0 0.0
    %1087 = vmatprep.subr.mxu0 0.0
    %1088 = vmatpush1.msra.mxu0 0.0
    %1089 = vmatprep.subr.mxu0 0.0
    %1090 = vmatpush1.msra.mxu0 0.0
    %1091 = vmatprep.subr.mxu0 0.0
    %1092 = vmatpush1.msra.mxu0 0.0
    %1093 = vmatprep.subr.mxu0 0.0
    %1094 = vmatpush1.msra.mxu0 0.0
    %1095 = vmatprep.subr.mxu0 0.0
    %1096 = vmatpush1.msra.mxu0 0.0
    %1097 = vmatprep.subr.mxu0 0.0
    %1098 = vmatpush1.msra.mxu0 0.0
    %1099 = vmatprep.subr.mxu0 0.0
    %1100 = vmatpush1.msra.mxu0 0.0
    %1101 = vmatprep.subr.mxu0 0.0
    %1102 = vmatpush1.msra.mxu0 0.0
    %1103 = vmatprep.subr.mxu0 0.0
    %1104 = vmatpush1.msra.mxu0 0.0
    %1105 = vmatprep.subr.mxu0 0.0
    %1106 = vmatpush1.msra.mxu0 0.0
    %1107 = vmatprep.subr.mxu0 0.0
    %1108 = vmatpush1.msra.mxu0 0.0
    %1109 = vmatprep.subr.mxu0 0.0
    %1110 = vmatpush1.msra.mxu0 0.0
    %1111 = vmatprep.subr.mxu0 0.0
    %1112 = vmatpush1.msra.mxu0 0.0
    %1113 = vmatprep.subr.mxu0 0.0
    %1114 = vmatpush1.msra.mxu0 0.0
    %1115 = vmatprep.subr.mxu0 0.0
    %1116 = vmatpush1.msra.mxu0 0.0
    %1117 = vmatprep.subr.mxu0 0.0
    %1118 = vmatpush1.msra.mxu0 0.0
    %1119 = vmatprep.subr.mxu0 0.0
    %1120 = vmatpush1.msra.mxu0 0.0
    %1121 = vmatprep.subr.mxu0 0.0
    %1122 = vmatpush1.msra.mxu0 0.0
    %1123 = vmatprep.subr.mxu0 0.0
    %1124 = vmatpush1.msra.mxu0 0.0
    %1125 = vmatprep.mubr.f32.mxu0 0.0
    %1126 = vmatmul.mubr.f32.gmra.mrb[0].mxu0 %v1059
    %v1127 = vpop.f32.mrb[0].mxu0
    %v1128 = vadd.f32 0.0, %v1127
    %v1129 = vpop.f32.mrb[0].mxu0
    %v1130 = vadd.f32 0.0, %v1129
    %1131 = vdwg.mxu0
    %v1132 = vadd.f32 %v1055, %v1128
    %v1133 = vadd.f32 %v1056, %v1130
    %v1134 = vxor.u32 %v1132, 2147483648
    %v1135 = vmul.f32 %v1134, 1.442695
    %v1136 = vpow.pop %v1135
    %v1137 = vadd.f32 %v1136, 1.0
    %v1138 = vrcp.pop %v1137
    %v1139 = vmul.f32 1.0, %v1138
    %v1140 = vtanh.pop %v1133
    %v1141 = vxor.u32 %v1133, 2147483648
    %v1142 = vmul.f32 %v1141, 1.442695
    %v1143 = vpow.pop %v1142
    %v1144 = vadd.f32 %v1143, 1.0
    %v1145 = vrcp.pop %v1144
    %v1146 = vmul.f32 1.0, %v1145
    %v1147 = vmul.f32 %v1139, %v1047
    %v1148 = vmul.f32 %v1139, %v1140
    %1150 = vrot.lane.b32.xlu0 %v1148, 64
    %v1151 = vpop.permute.xlu0 %1150
    %v1153 = vadd.f32 %v1147, %v1151
    %v1154 = vtanh.pop %v1153
    %v1155 = vmul.f32 %v1146, %v1154
    %1157 = vrot.lane.b32.xlu0 %v1155, 32
    %v1158 = vpop.permute.xlu0 %1157
    %1160 = vst.msk [vmem:[#allocation3 + $0x30] sm:$0xff] %vm288, %v1158
    %v1161 = vld [vmem:[#allocation2 + $0x80] sm:$0xff]
    %v1162 = vld [vmem:[#allocation2 + $0x88] sm:$0xff]
    %1163 = vrot.lane.b32.xlu0 %v1155, 64
    %v1164 = vpop.permute.xlu0 %1163
    %v1165 = vsel %vm303, %v1164, 0
    %1167 = vmatprep.subr.mxu0 %v266
    %1168 = vmatpush1.msra.mxu0 %v265
    %1169 = vmatprep.subr.mxu0 %v268
    %1170 = vmatpush1.msra.mxu0 %v267
    %1171 = vmatprep.subr.mxu0 %v270
    %1172 = vmatpush1.msra.mxu0 %v269
    %1173 = vmatprep.subr.mxu0 %v272
    %1174 = vmatpush1.msra.mxu0 %v271
    %1175 = vmatprep.subr.mxu0 %v274
    %1176 = vmatpush1.msra.mxu0 %v273
    %1177 = vmatprep.subr.mxu0 %v276
    %1178 = vmatpush1.msra.mxu0 %v275
    %1179 = vmatprep.subr.mxu0 %v278
    %1180 = vmatpush1.msra.mxu0 %v277
    %1181 = vmatprep.subr.mxu0 %v280
    %1182 = vmatpush1.msra.mxu0 %v279
    %1183 = vmatprep.subr.mxu0 0.0
    %1184 = vmatpush1.msra.mxu0 0.0
    %1185 = vmatprep.subr.mxu0 0.0
    %1186 = vmatpush1.msra.mxu0 0.0
    %1187 = vmatprep.subr.mxu0 0.0
    %1188 = vmatpush1.msra.mxu0 0.0
    %1189 = vmatprep.subr.mxu0 0.0
    %1190 = vmatpush1.msra.mxu0 0.0
    %1191 = vmatprep.subr.mxu0 0.0
    %1192 = vmatpush1.msra.mxu0 0.0
    %1193 = vmatprep.subr.mxu0 0.0
    %1194 = vmatpush1.msra.mxu0 0.0
    %1195 = vmatprep.subr.mxu0 0.0
    %1196 = vmatpush1.msra.mxu0 0.0
    %1197 = vmatprep.subr.mxu0 0.0
    %1198 = vmatpush1.msra.mxu0 0.0
    %1199 = vmatprep.subr.mxu0 0.0
    %1200 = vmatpush1.msra.mxu0 0.0
    %1201 = vmatprep.subr.mxu0 0.0
    %1202 = vmatpush1.msra.mxu0 0.0
    %1203 = vmatprep.subr.mxu0 0.0
    %1204 = vmatpush1.msra.mxu0 0.0
    %1205 = vmatprep.subr.mxu0 0.0
    %1206 = vmatpush1.msra.mxu0 0.0
    %1207 = vmatprep.subr.mxu0 0.0
    %1208 = vmatpush1.msra.mxu0 0.0
    %1209 = vmatprep.subr.mxu0 0.0
    %1210 = vmatpush1.msra.mxu0 0.0
    %1211 = vmatprep.subr.mxu0 0.0
    %1212 = vmatpush1.msra.mxu0 0.0
    %1213 = vmatprep.subr.mxu0 0.0
    %1214 = vmatpush1.msra.mxu0 0.0
    %1215 = vmatprep.subr.mxu0 0.0
    %1216 = vmatpush1.msra.mxu0 0.0
    %1217 = vmatprep.subr.mxu0 0.0
    %1218 = vmatpush1.msra.mxu0 0.0
    %1219 = vmatprep.subr.mxu0 0.0
    %1220 = vmatpush1.msra.mxu0 0.0
    %1221 = vmatprep.subr.mxu0 0.0
    %1222 = vmatpush1.msra.mxu0 0.0
    %1223 = vmatprep.subr.mxu0 0.0
    %1224 = vmatpush1.msra.mxu0 0.0
    %1225 = vmatprep.subr.mxu0 0.0
    %1226 = vmatpush1.msra.mxu0 0.0
    %1227 = vmatprep.subr.mxu0 0.0
    %1228 = vmatpush1.msra.mxu0 0.0
    %1229 = vmatprep.subr.mxu0 0.0
    %1230 = vmatpush1.msra.mxu0 0.0
    %1231 = vmatprep.mubr.f32.mxu0 0.0
    %1232 = vmatmul.mubr.f32.gmra.mrb[0].mxu0 %v1165
    %v1233 = vpop.f32.mrb[0].mxu0
    %v1234 = vadd.f32 0.0, %v1233
    %v1235 = vpop.f32.mrb[0].mxu0
    %v1236 = vadd.f32 0.0, %v1235
    %1237 = vdwg.mxu0
    %v1238 = vadd.f32 %v1161, %v1234
    %v1239 = vadd.f32 %v1162, %v1236
    %v1240 = vxor.u32 %v1238, 2147483648
    %v1241 = vmul.f32 %v1240, 1.442695
    %v1242 = vpow.pop %v1241
    %v1243 = vadd.f32 %v1242, 1.0
    %v1244 = vrcp.pop %v1243
    %v1245 = vmul.f32 1.0, %v1244
    %v1246 = vtanh.pop %v1239
    %v1247 = vxor.u32 %v1239, 2147483648
    %v1248 = vmul.f32 %v1247, 1.442695
    %v1249 = vpow.pop %v1248
    %v1250 = vadd.f32 %v1249, 1.0
    %v1251 = vrcp.pop %v1250
    %v1252 = vmul.f32 1.0, %v1251
    %v1253 = vmul.f32 %v1245, %v1153
    %v1254 = vmul.f32 %v1245, %v1246
    %1256 = vrot.lane.b32.xlu0 %v1254, 64
    %v1257 = vpop.permute.xlu0 %1256
    %v1259 = vadd.f32 %v1253, %v1257
    %v1260 = vtanh.pop %v1259
    %v1261 = vmul.f32 %v1252, %v1260
    %1263 = vrot.lane.b32.xlu0 %v1153, 64
    %v1264 = vpop.permute.xlu0 %1263
    %1267 = vrot.lane.b32.xlu0 %v1259, 64
    %v1268 = vpop.permute.xlu0 %1267
    %v1270 = vsel %vm300, %v1264, %v1268
    %1273 = vrot.lane.b32.xlu0 %v1261, 64
    %v1274 = vpop.permute.xlu0 %1273
    %v1276 = vsel %vm300, %v1164, %v1274
    %1278 = vrot.lane.b32.xlu0 %v1276, 96
    %v1279 = vpop.permute.xlu0 %1278
    %1281 = vst.msk [vmem:[#allocation3 + $0x38] sm:$0xff] %vm288, %v1279
    %1282 = vst.msk [vmem:[#allocation10] sm:$0xff] %vm288, %v1276
    %s1283 = scalar_lea.vmem [#allocation10], 8
    %1284 = vst.msk [vmem:[%s1283] sm:$0xff] %vm288, %v1279
    %1285 = vst.msk [vmem:[#allocation11] sm:$0xff] %vm288, %v1270
    %1287 = vrot.lane.b32.xlu0 %v1270, 96
    %v1288 = vpop.permute.xlu0 %1287
    %s1290 = scalar_lea.vmem [#allocation11], 8
    %1291 = vst.msk [vmem:[%s1290] sm:$0xff] %vm288, %v1288
    %v1292 = vld [vmem:[#allocation3] sm:$0xff]
    %v1293 = vld [vmem:[#allocation3 + $0x8] sm:$0xff]
    %v1294 = vld [vmem:[#allocation3 + $0x10] sm:$0xff]
    %v1295 = vld [vmem:[#allocation3 + $0x18] sm:$0xff]
    %v1296 = vld [vmem:[#allocation3 + $0x20] sm:$0xff]
    %v1297 = vld [vmem:[#allocation3 + $0x28] sm:$0xff]
    %v1298 = vld [vmem:[#allocation3 + $0x30] sm:$0xff]
    %v1299 = vld [vmem:[#allocation3 + $0x38] sm:$0xff]
    %v1300 = vld [vmem:[#allocation9] sm:$0xff]
    %v1301 = vld [vmem:[#allocation9 + $0x8] sm:$0xff]
    %v1302 = vld [vmem:[#allocation9 + $0x10] sm:$0xff]
    %v1303 = vld [vmem:[#allocation9 + $0x18] sm:$0xff]
    %v1304 = vld [vmem:[%s7] sm:$0x1]
    %v1306 = vlaneseq
    %v1307 = vshrl.u32 %v1306, 7
    %v1308 = vsub.s32 0, %v1307
    %v1309 = vrot.slane %v1304, %v1308
    %v1312 = vsel %vm288, %v1292, 0
    %v1315 = vsel %vm288, %v1293, 0
    %v1318 = vsel %vm288, %v1294, 0
    %v1321 = vsel %vm288, %v1295, 0
    %v1324 = vsel %vm288, %v1296, 0
    %v1327 = vsel %vm288, %v1297, 0
    %v1330 = vsel %vm288, %v1298, 0
    %v1333 = vsel %vm288, %v1299, 0
    %1335 = vmatprep.subr.mxu0 0.0
    %1336 = vmatpush1.msra.mxu0 %v1300
    %1337 = vmatprep.subr.mxu0 0.0
    %1338 = vmatpush1.msra.mxu0 %v1301
    %1339 = vmatprep.subr.mxu0 0.0
    %1340 = vmatpush1.msra.mxu0 %v1302
    %1341 = vmatprep.subr.mxu0 0.0
    %1342 = vmatpush1.msra.mxu0 %v1303
    %1343 = vmatprep.subr.mxu0 0.0
    %1344 = vmatpush1.msra.mxu0 0.0
    %1345 = vmatprep.subr.mxu0 0.0
    %1346 = vmatpush1.msra.mxu0 0.0
    %1347 = vmatprep.subr.mxu0 0.0
    %1348 = vmatpush1.msra.mxu0 0.0
    %1349 = vmatprep.subr.mxu0 0.0
    %1350 = vmatpush1.msra.mxu0 0.0
    %1351 = vmatprep.subr.mxu0 0.0
    %1352 = vmatpush1.msra.mxu0 0.0
    %1353 = vmatprep.subr.mxu0 0.0
    %1354 = vmatpush1.msra.mxu0 0.0
    %1355 = vmatprep.subr.mxu0 0.0
    %1356 = vmatpush1.msra.mxu0 0.0
    %1357 = vmatprep.subr.mxu0 0.0
    %1358 = vmatpush1.msra.mxu0 0.0
    %1359 = vmatprep.subr.mxu0 0.0
    %1360 = vmatpush1.msra.mxu0 0.0
    %1361 = vmatprep.subr.mxu0 0.0
    %1362 = vmatpush1.msra.mxu0 0.0
    %1363 = vmatprep.subr.mxu0 0.0
    %1364 = vmatpush1.msra.mxu0 0.0
    %1365 = vmatprep.subr.mxu0 0.0
    %1366 = vmatpush1.msra.mxu0 0.0
    %1367 = vmatprep.subr.mxu0 0.0
    %1368 = vmatpush1.msra.mxu0 0.0
    %1369 = vmatprep.subr.mxu0 0.0
    %1370 = vmatpush1.msra.mxu0 0.0
    %1371 = vmatprep.subr.mxu0 0.0
    %1372 = vmatpush1.msra.mxu0 0.0
    %1373 = vmatprep.subr.mxu0 0.0
    %1374 = vmatpush1.msra.mxu0 0.0
    %1375 = vmatprep.subr.mxu0 0.0
    %1376 = vmatpush1.msra.mxu0 0.0
    %1377 = vmatprep.subr.mxu0 0.0
    %1378 = vmatpush1.msra.mxu0 0.0
    %1379 = vmatprep.subr.mxu0 0.0
    %1380 = vmatpush1.msra.mxu0 0.0
    %1381 = vmatprep.subr.mxu0 0.0
    %1382 = vmatpush1.msra.mxu0 0.0
    %1383 = vmatprep.subr.mxu0 0.0
    %1384 = vmatpush1.msra.mxu0 0.0
    %1385 = vmatprep.subr.mxu0 0.0
    %1386 = vmatpush1.msra.mxu0 0.0
    %1387 = vmatprep.subr.mxu0 0.0
    %1388 = vmatpush1.msra.mxu0 0.0
    %1389 = vmatprep.subr.mxu0 0.0
    %1390 = vmatpush1.msra.mxu0 0.0
    %1391 = vmatprep.subr.mxu0 0.0
    %1392 = vmatpush1.msra.mxu0 0.0
    %1393 = vmatprep.subr.mxu0 0.0
    %1394 = vmatpush1.msra.mxu0 0.0
    %1395 = vmatprep.subr.mxu0 0.0
    %1396 = vmatpush1.msra.mxu0 0.0
    %1397 = vmatprep.subr.mxu0 0.0
    %1398 = vmatpush1.msra.mxu0 0.0
    %1399 = vmatprep.mubr.f32.mxu0 0.0
    %1400 = vmatmul.mubr.f32.gmra.mrb[0].mxu0 %v1312
    %v1401 = vpop.f32.mrb[0].mxu0
    %v1402 = vadd.f32 %v1309, %v1401
    %v1403 = vpop.f32.mrb[0].mxu0
    %1404 = vmatprep.mubr.f32.mxu0 0.0
    %1405 = vmatmul.mubr.f32.gmra.mrb[0].mxu0 %v1315
    %v1406 = vpop.f32.mrb[0].mxu0
    %v1407 = vadd.f32 %v1309, %v1406
    %v1408 = vpop.f32.mrb[0].mxu0
    %1409 = vmatprep.mubr.f32.mxu0 0.0
    %1410 = vmatmul.mubr.f32.gmra.mrb[0].mxu0 %v1318
    %v1411 = vpop.f32.mrb[0].mxu0
    %v1412 = vadd.f32 %v1309, %v1411
    %v1413 = vpop.f32.mrb[0].mxu0
    %1414 = vmatprep.mubr.f32.mxu0 0.0
    %1415 = vmatmul.mubr.f32.gmra.mrb[0].mxu0 %v1321
    %v1416 = vpop.f32.mrb[0].mxu0
    %v1417 = vadd.f32 %v1309, %v1416
    %v1418 = vpop.f32.mrb[0].mxu0
    %1419 = vmatprep.mubr.f32.mxu0 0.0
    %1420 = vmatmul.mubr.f32.gmra.mrb[0].mxu0 %v1324
    %v1421 = vpop.f32.mrb[0].mxu0
    %v1422 = vadd.f32 %v1309, %v1421
    %v1423 = vpop.f32.mrb[0].mxu0
    %1424 = vmatprep.mubr.f32.mxu0 0.0
    %1425 = vmatmul.mubr.f32.gmra.mrb[0].mxu0 %v1327
    %v1426 = vpop.f32.mrb[0].mxu0
    %v1427 = vadd.f32 %v1309, %v1426
    %v1428 = vpop.f32.mrb[0].mxu0
    %1429 = vmatprep.mubr.f32.mxu0 0.0
    %1430 = vmatmul.mubr.f32.gmra.mrb[0].mxu0 %v1330
    %v1431 = vpop.f32.mrb[0].mxu0
    %v1432 = vadd.f32 %v1309, %v1431
    %v1433 = vpop.f32.mrb[0].mxu0
    %1434 = vmatprep.mubr.f32.mxu0 0.0
    %1435 = vmatmul.mubr.f32.gmra.mrb[0].mxu0 %v1333
    %v1436 = vpop.f32.mrb[0].mxu0
    %v1437 = vadd.f32 %v1309, %v1436
    %v1438 = vpop.f32.mrb[0].mxu0
    %1439 = vdwg.mxu0
    %vm1440 = vcmp.lt.s32.totalorder %v299, 16
    %v1441 = vxor.u32 %v1402, 2147483648
    %v1442 = vxor.u32 %v1407, 2147483648
    %v1443 = vxor.u32 %v1412, 2147483648
    %v1444 = vxor.u32 %v1417, 2147483648
    %v1445 = vxor.u32 %v1422, 2147483648
    %v1446 = vxor.u32 %v1427, 2147483648
    %v1447 = vxor.u32 %v1432, 2147483648
    %v1448 = vxor.u32 %v1437, 2147483648
    %v1449 = vmul.f32 %v1441, 1.442695
    %v1450 = vpow.pop %v1449
    %v1451 = vmul.f32 %v1442, 1.442695
    %v1452 = vpow.pop %v1451
    %v1453 = vmul.f32 %v1443, 1.442695
    %v1454 = vpow.pop %v1453
    %v1455 = vmul.f32 %v1444, 1.442695
    %v1456 = vpow.pop %v1455
    %v1457 = vmul.f32 %v1445, 1.442695
    %v1458 = vpow.pop %v1457
    %v1459 = vmul.f32 %v1446, 1.442695
    %v1460 = vpow.pop %v1459
    %v1461 = vmul.f32 %v1447, 1.442695
    %v1462 = vpow.pop %v1461
    %v1463 = vmul.f32 %v1448, 1.442695
    %v1464 = vpow.pop %v1463
    %v1465 = vadd.f32 %v1450, 1.0
    %v1466 = vadd.f32 %v1452, 1.0
    %v1467 = vadd.f32 %v1454, 1.0
    %v1468 = vadd.f32 %v1456, 1.0
    %v1469 = vadd.f32 %v1458, 1.0
    %v1470 = vadd.f32 %v1460, 1.0
    %v1471 = vadd.f32 %v1462, 1.0
    %v1472 = vadd.f32 %v1464, 1.0
    %v1473 = vrcp.pop %v1465
    %v1474 = vmul.f32 1.0, %v1473
    %v1475 = vrcp.pop %v1466
    %v1476 = vmul.f32 1.0, %v1475
    %v1477 = vrcp.pop %v1467
    %v1478 = vmul.f32 1.0, %v1477
    %v1479 = vrcp.pop %v1468
    %v1480 = vmul.f32 1.0, %v1479
    %v1481 = vrcp.pop %v1469
    %v1482 = vmul.f32 1.0, %v1481
    %v1483 = vrcp.pop %v1470
    %v1484 = vmul.f32 1.0, %v1483
    %v1485 = vrcp.pop %v1471
    %v1486 = vmul.f32 1.0, %v1485
    %v1487 = vrcp.pop %v1472
    %v1488 = vmul.f32 1.0, %v1487
    %v1489 = vsel %vm1440, %v1402, %v1474
    %v1490 = vsel %vm1440, %v1407, %v1476
    %v1491 = vsel %vm1440, %v1412, %v1478
    %v1492 = vsel %vm1440, %v1417, %v1480
    %v1493 = vsel %vm1440, %v1422, %v1482
    %v1494 = vsel %vm1440, %v1427, %v1484
    %v1495 = vsel %vm1440, %v1432, %v1486
    %v1496 = vsel %vm1440, %v1437, %v1488
    %1497 = vst.msk [vmem:[%s8] sm:$0xff] %vm288, %v1489
    %1498 = vst.msk [vmem:[%s8 + $0x8] sm:$0xff] %vm288, %v1490
    %1499 = vst.msk [vmem:[%s8 + $0x10] sm:$0xff] %vm288, %v1491
    %1500 = vst.msk [vmem:[%s8 + $0x18] sm:$0xff] %vm288, %v1492
    %1501 = vst.msk [vmem:[%s8 + $0x20] sm:$0xff] %vm288, %v1493
    %1502 = vst.msk [vmem:[%s8 + $0x28] sm:$0xff] %vm288, %v1494
    %1503 = vst.msk [vmem:[%s8 + $0x30] sm:$0xff] %vm288, %v1495
    %1504 = vst.msk [vmem:[%s8 + $0x38] sm:$0xff] %vm288, %v1496
    // Predicated region
    $region46: #{policy_net_forward.1} parent=1 // pred_check
      _
    $region47: #{policy_net_forward.1} parent=1 // pred_check_branch
      %1506 = sbr.rel (0) target = $region49
    $region48: #{policy_net_forward.1} parent=1 // pred_region
      _
    $region49: #{policy_net_forward.1} parent=1 // pred_fallthru
      _
    // Predicated region
    $region50: #{policy_net_forward.1} parent=1 // pred_check
      _
    $region51: #{policy_net_forward.1} parent=1 // pred_check_branch
      %1508 = sbr.rel (0) target = $region53
    $region52: #{policy_net_forward.1} parent=1 // pred_region
      %s1510 = ssub.s32 256, 256
      %1511 = vsyncadd [#allocation6], %s1510
      %s1512 = sshll.u32 [#allocation10], 4
      %s1513 = int_to_ptr.vmem [resolvable:$true] %s1512
      %1518 = dma.vmem_to_hbm [thread:$0]  %s1513, 256, %s9, [#allocation6], 128, 128, 8
    $region53: #{policy_net_forward.1} parent=1 // pred_fallthru
      _
    // Predicated region
    $region54: #{policy_net_forward.1} parent=1 // pred_check
      _
    $region55: #{policy_net_forward.1} parent=1 // pred_check_branch
      %1520 = sbr.rel (0) target = $region57
    $region56: #{policy_net_forward.1} parent=1 // pred_region
      %s1522 = ssub.s32 256, 256
      %1523 = vsyncadd [#allocation12], %s1522
      %s1524 = sshll.u32 [#allocation11], 4
      %s1525 = int_to_ptr.vmem [resolvable:$true] %s1524
      %1530 = dma.vmem_to_hbm [thread:$0]  %s1525, 256, %s10, [#allocation12], 128, 128, 8
    $region57: #{policy_net_forward.1} parent=1 // pred_fallthru
      _
    // Predicated region
    $region58: #{policy_net_forward.1} parent=1 // pred_check
      _
    $region59: #{policy_net_forward.1} parent=1 // pred_check_branch
      %1532 = sbr.rel (0) target = $region61
    $region60: #{policy_net_forward.1} parent=1 // pred_region
      _
    $region61: #{policy_net_forward.1} parent=1 // pred_fallthru
      _
    // Predicated region
    $region62: #{policy_net_forward.1} parent=1 // pred_check
      _
    $region63: #{policy_net_forward.1} parent=1 // pred_check_branch
      %1534 = sbr.rel (0) target = $region65
    $region64: #{policy_net_forward.1} parent=1 // pred_region
      %1535 = dma.done [#allocation6], 256
    $region65: #{policy_net_forward.1} parent=1 // pred_fallthru
      _
    // Predicated region
    $region66: #{policy_net_forward.1} parent=1 // pred_check
      _
    $region67: #{policy_net_forward.1} parent=1 // pred_check_branch
      %1537 = sbr.rel (0) target = $region69
    $region68: #{policy_net_forward.1} parent=1 // pred_region
      %1538 = dma.done [#allocation12], 256
    $region69: #{policy_net_forward.1} parent=1 // pred_fallthru
      _
    %1539 = vsyncpa [#allocation5], 1
    %1540 = vsyncpa [#allocation8], 1
    %1541 = vsyncpa [#allocation6], 1
    %1542 = vsyncpa [#allocation12], 1

</llo_original>
